<compile_context>
chip_gen: v6e
topology: v6e:2x2x1
jax: 0.10.0
libtpu: 0.0.40
codegen_flags: <defaults>
</compile_context>

<pallas_src>
import jax
import jax.numpy as jnp
from jax.experimental import pallas as pl
from jax.experimental.pallas import tpu as pltpu

LANE = 128
SUBLANE = 8
_MIN_PALLAS_BYTES = 256 * 1024  # below this, plain jnp (fusable, no launch overhead)


def _round_up(v, m):
    return ((v + m - 1) // m) * m


def _tile_bytes_for_device():
    """Per-buffer VMEM tile budget. in + out are each double-buffered => ~4x this live."""
    try:
        kind = jax.devices()[0].device_kind.lower()
    except Exception:
        kind = ""
    if "v7" in kind or "7x" in kind:
        return 6 * 1024 * 1024   # 4 x 6 MiB = 24 MiB < 32 MiB default scoped VMEM
    if "v6" in kind:
        return 4 * 1024 * 1024   # 16 MiB total < 32 MiB
    if "v5" in kind:
        return 3 * 1024 * 1024   # 12 MiB total < 16 MiB (v5e default scoped VMEM)
    return 2 * 1024 * 1024       # unknown/older generations: conservative


def _lab_kernel(scale_ref, bias_ref, x_ref, o_ref):
    # scale_ref / bias_ref: (1,) f32 scalars in SMEM.
    # x_ref / o_ref: (tile_rows, width) VMEM tiles.
    # FMA in f32 (matches PyTorch's f32 scalar Parameters); cast only at the store.
    x = x_ref[...].astype(jnp.float32)
    y = scale_ref[0] * x + bias_ref[0]
    o_ref[...] = y.astype(o_ref.dtype)


def _lab_2d(x2d, scale1, bias1, *, donate_input=False):
    """Affine kernel over a lane-dense 2D slab (rows, width), width % 128 == 0."""
    rows, width = x2d.shape
    row_bytes = width * x2d.dtype.itemsize
    budget = _tile_bytes_for_device()

    if rows <= SUBLANE:
        tile_rows = rows  # single full-extent block (always legal)
    else:
        nominal = max(SUBLANE, (budget // row_bytes) // SUBLANE * SUBLANE)
        # >= 2 (ideally an even number of) near-equal row blocks so v7x's two
        # TensorCores both get work; ~0.35 us extra step cost on 1-TC chips is noise.
        desired_blocks = max(2, pl.cdiv(rows, nominal))
        if desired_blocks % 2:
            desired_blocks += 1
        tile_rows = min(nominal, _round_up(pl.cdiv(rows, desired_blocks), SUBLANE))
        tile_rows = max(SUBLANE, min(tile_rows, _round_up(rows, SUBLANE)))

    grid = (pl.cdiv(rows, tile_rows),)  # trailing partial block is masked by Pallas

    return pl.pallas_call(
        _lab_kernel,
        out_shape=jax.ShapeDtypeStruct((rows, width), x2d.dtype),
        grid_spec=pltpu.PrefetchScalarGridSpec(
            num_scalar_prefetch=0,
            grid=grid,
            in_specs=[
                pl.BlockSpec(memory_space=pltpu.MemorySpace.SMEM),   # scale (1,)
                pl.BlockSpec(memory_space=pltpu.MemorySpace.SMEM),   # bias  (1,)
                pl.BlockSpec((tile_rows, width), lambda i: (i, 0)),  # x tile
            ],
            out_specs=pl.BlockSpec((tile_rows, width), lambda i: (i, 0)),
        ),
        compiler_params=pltpu.CompilerParams(
            dimension_semantics=("parallel",),
        ),
        input_output_aliases=({2: 0} if donate_input else {}),
    )(scale1, bias1, x2d)


def learnable_affine_block(x, scale, bias, *, donate_input=False):
    """Apply y = scale * x + bias elementwise via a Pallas TPU kernel.

    x:     any-shape float array (e.g. NCHW activations)
    scale: shape (1,) float32 parameter
    bias:  shape (1,) float32 parameter
    donate_input: alias x's HBM buffer to the output (only if caller no longer needs x).
    """
    orig_shape = x.shape
    n = x.size
    scale1 = jnp.reshape(scale, (1,)).astype(jnp.float32)
    bias1 = jnp.reshape(bias, (1,)).astype(jnp.float32)

    def _jnp_affine(arr):
        # Single fused XLA elementwise pass; f32 internal math, cast back at the end.
        y = scale1[0] * arr.astype(jnp.float32) + bias1[0]
        return y.astype(arr.dtype)

    # Small-tensor fast path: pallas_call launch + pipeline prologue dominates and the
    # custom call is an XLA fusion barrier; plain jnp fuses with neighboring conv/BN/ReLU.
    if n * x.dtype.itemsize < _MIN_PALLAS_BYTES:
        return _jnp_affine(x)

    # Widest lane-dense slab width that exactly divides n -> contiguous reshape, no copy.
    width = next((w for w in (1024, 512, 256, 128) if n % w == 0), None)
    if width is None:
        # Ragged size (n % 128 != 0): a single fused jnp pass over the whole tensor is
        # strictly cheaper than kernel-on-the-bulk + a full-array concatenate.
        return _jnp_affine(x)

    flat = jnp.reshape(x, (-1,))  # contiguous reshape: no HBM copy
    out2d = _lab_2d(jnp.reshape(flat, (n // width, width)), scale1, bias1,
                    donate_input=donate_input)
    return jnp.reshape(out2d, orig_shape)


if __name__ == "__main__":
    # LearnableAffineBlock.__init__ defaults are scale=1.0, bias=0.0; use non-default
    # values so both the multiply and add are exercised.
    scale_value = 1.5
    bias_value = -0.25
    scale = jnp.full((1,), scale_value, dtype=jnp.float32)
    bias = jnp.full((1,), bias_value, dtype=jnp.float32)

    key = jax.random.PRNGKey(0)
    k0, k1, k2, k3 = jax.random.split(key, 4)

    # 1) Small NCHW activations, as seen inside HGV2_Stage (8 KiB -> fused jnp fast path).
    x = jax.random.normal(k0, (2, 4, 16, 16), dtype=jnp.float32)
    y = jax.block_until_ready(learnable_affine_block(x, scale, bias))
    assert y.shape == x.shape and y.dtype == x.dtype
    assert jnp.allclose(y, scale_value * x + bias_value, atol=1e-6), "mismatch (primary)"

    # 2) Kernel path: >= 2 balanced grid blocks (v7x megacore), lane-dense width=1024.
    x_big = jax.random.normal(k1, (3, 64, 72, 64), dtype=jnp.float32)   # 864 x 1024 elems
    y_big = jax.block_until_ready(learnable_affine_block(x_big, scale, bias))
    assert jnp.allclose(y_big, scale_value * x_big + bias_value, atol=1e-6), "mismatch (big)"

    # 3) Kernel path with a masked trailing partial row-block (rows % tile_rows != 0).
    x_part = jax.random.normal(k2, (2, 48, 75, 64), dtype=jnp.float32)  # 450 x 1024 elems
    y_part = jax.block_until_ready(learnable_affine_block(x_part, scale, bias))
    assert jnp.allclose(y_part, scale_value * x_part + bias_value, atol=1e-6), "mismatch (partial)"

    # 4) bf16 input: kernel upcasts to f32 for the FMA and casts back only at the store.
    x_bf = jax.random.normal(k3, (2, 64, 64, 64), dtype=jnp.float32).astype(jnp.bfloat16)
    y_bf = jax.block_until_ready(learnable_affine_block(x_bf, scale, bias))
    ref_bf = (scale_value * x_bf.astype(jnp.float32) + bias_value).astype(jnp.bfloat16)
    assert y_bf.dtype == jnp.bfloat16
    assert jnp.allclose(y_bf.astype(jnp.float32), ref_bf.astype(jnp.float32),
                        atol=1e-2), "mismatch (bf16)"

    # 5) Ragged element count (n % 128 != 0): single fused jnp pass (no kernel + concat).
    x_rag = jax.random.normal(k0, (2, 3, 5, 7), dtype=jnp.float32)
    y_rag = jax.block_until_ready(learnable_affine_block(x_rag, scale, bias))
    assert jnp.allclose(y_rag, scale_value * x_rag + bias_value, atol=1e-6), "mismatch (ragged)"

    print("KERNEL_OK")
</pallas_src>

<mosaic_0001>
module attributes {stable_mosaic.version = 11 : i64} {
  func.func @_lab_kernel(%arg0: i32, %arg1: memref<1xf32, #tpu.memory_space<smem>>, %arg2: memref<1xf32, #tpu.memory_space<smem>>, %arg3: memref<432x1024xf32, #tpu.memory_space<vmem>>, %arg4: memref<432x1024xf32, #tpu.memory_space<vmem>>) attributes {dimension_semantics = [#tpu.dimension_semantics<parallel>], iteration_bounds = array<i64: 2>, scalar_prefetch = 0 : i64, scratch_operands = 0 : i64, tpu.core_type = #tpu.core_type<tc>, window_params = [{transform_indices = @transform_0, window_bounds = array<i64: 1>}, {transform_indices = @transform_1, window_bounds = array<i64: 1>}, {transform_indices = @transform_2, window_bounds = array<i64: 432, 1024>}, {transform_indices = @transform_3, window_bounds = array<i64: 432, 1024>}]} {
    %c0 = arith.constant 0 : index
    %c0_0 = arith.constant 0 : index
    %0 = vector.load %arg3[%c0, %c0_0] : memref<432x1024xf32, #tpu.memory_space<vmem>>, vector<432x1024xf32>
    %c0_1 = arith.constant 0 : index
    %1 = memref.load %arg1[%c0_1] : memref<1xf32, #tpu.memory_space<smem>>
    %2 = vector.broadcast %1 : f32 to vector<432x1024xf32>
    %3 = arith.mulf %2, %0 : vector<432x1024xf32>
    %c0_2 = arith.constant 0 : index
    %4 = memref.load %arg2[%c0_2] : memref<1xf32, #tpu.memory_space<smem>>
    %5 = vector.broadcast %4 : f32 to vector<432x1024xf32>
    %6 = arith.addf %3, %5 : vector<432x1024xf32>
    %c0_3 = arith.constant 0 : index
    %c0_4 = arith.constant 0 : index
    %7 = vector.load %arg4[%c0_3, %c0_4] : memref<432x1024xf32, #tpu.memory_space<vmem>>, vector<432x1024xf32>
    tpu.vector_store %arg4[%c0_3, %c0_4], %6 {strides = array<i32>} : memref<432x1024xf32, #tpu.memory_space<vmem>>, vector<432x1024xf32>,
    return
  }
  func.func @transform_0(%arg0: i32) -> i32 {
    %c0_i32 = arith.constant 0 : i32
    %c0_i32_0 = arith.constant 0 : i32
    return %c0_i32 : i32
  }
  func.func @transform_1(%arg0: i32) -> i32 {
    %c0_i32 = arith.constant 0 : i32
    %c0_i32_0 = arith.constant 0 : i32
    return %c0_i32 : i32
  }
  func.func @transform_2(%arg0: i32) -> (i32, i32) {
    %c0_i32 = arith.constant 0 : i32
    %c0_i32_0 = arith.constant 0 : i32
    return %arg0, %c0_i32 : i32, i32
  }
  func.func @transform_3(%arg0: i32) -> (i32, i32) {
    %c0_i32 = arith.constant 0 : i32
    %c0_i32_0 = arith.constant 0 : i32
    return %arg0, %c0_i32 : i32, i32
  }
}

</mosaic_0001>

<llo_original>
// kernel: tpu_custom_call.1
$region0: #{tpu_custom_call.1}
  #allocation0 [shape = 'u32[]', space=smem, size = 0x4, offset = 0x4, fixed_abs, tag = 'smem constant byte address 0x4 - core index']
  #allocation1 [shape = 'u32[144,128]{1,0:T(1,128)}', space=vmem, size = 0x12000, scoped, tag = 'internal scratch']
  #allocation2 [shape = 'f32[1]{0:T(128)S(6)}', space=smem, size = 0x200, scoped, tag = 'scoped memory for tpu_custom_call.1']
  #allocation3 [shape = 'f32[1]{0:T(128)S(6)}', space=smem, size = 0x200, scoped, tag = 'scoped memory for tpu_custom_call.1']
  %s0 = inlined_call_operand.<no memory space> [shape: f32[1], index: 0, kind: input, shape index: {}]
  %s1 = inlined_call_operand.<no memory space> [shape: f32[1], index: 1, kind: input, shape index: {}]
  %s2 = inlined_call_operand.hbm [shape: f32[864,1024], index: 2, kind: input, shape index: {}]
  %s3 = inlined_call_operand.hbm [shape: f32[864,1024], index: 3, kind: output, shape index: {}]
  %s4 = sld [smem:[#allocation0]]
  $region49: #{tpu_custom_call.1} parent=0
    _
  %s6 = ssub.s32 1, %s4
  %s7 = scalar_select 0, %s6, %s4
  %8 = sst [smem:[#allocation2]] %s0
  %9 = sst [smem:[#allocation3]] %s1
  $region1: #{tpu_custom_call.1} parent=0
    #allocation4 [shape = 'u8[3538944]{0}', space=vmem, size = 0x360000, scoped, tag = 'input window, operand 2']
    #allocation5 [shape = 's32[2]{0}', space=sflag, size = 0x8, scoped, tag = 'scoped memory for tpu_custom_call.1']
    #allocation6 [shape = 's32[2]{0}', space=sflag, size = 0x8, scoped, tag = 'scoped memory for tpu_custom_call.1']
    #allocation7 [shape = 'u8[3538944]{0}', space=vmem, size = 0x360000, scoped, tag = 'output window, operand 0']
    %10 = vsyncpa [#allocation5], 0
    %s11 = scalar_lea.sflag [#allocation5], 1
    %12 = vsyncpa %s11, 0
    %13 = vsyncpa [#allocation6], 0
    %s14 = scalar_lea.sflag [#allocation6], 1
    %15 = vsyncpa %s14, 0
    loop: start=0, step=1, limit=4
    $region2: #{tpu_custom_call.1} parent=1 // loop_pre_header
      _
    $region3: #{tpu_custom_call.1} parent=1 // loop_header
      %s17 = sphi 0, %s21
      %p18 = scmp.ge.s32.totalorder %s17, 4
      %s25 = sphi 0, %s25
      %s27 = sphi 0, %s25
      %s28 = sphi 0, %s27
      %s42 = sphi 0, %s28
      %s46 = sphi 0, %s46
      %s48 = sphi 0, %s46
      %s49 = sphi 0, %s48
      %s63 = sphi 0, %s49
      %s69 = sphi 0, %s71
      %s72 = sphi 0, %s69
      %s73 = sphi 0, %s72
      %s89 = sphi 0, %s73
      %s95 = sphi 0, %s97
      %s98 = sphi 0, %s95
      %s99 = sphi 0, %s98
      %s115 = sphi 0, %s99
    $region4: #{tpu_custom_call.1} parent=1 // loop_header_branch
      %20 = sbr.rel (%p18) target = $region8
    $region5: #{tpu_custom_call.1} parent=1 // loop_body
      %s22 = ssub.s32 %s17, 1
      %s23 = ssub.s32 %s17, 2
      %s24 = sadd.s32 %s17, 1
      %s26 = sadd.s32 %s25, 1
      %p29 = scmp.eq.s32.totalorder %s17, 1
      %p30 = scmp.ne.s32.totalorder %s25, %s27
      %p31 = scmp.eq.s32.totalorder %s17, 0
      %p32 = por %p30, %p31
      %p33 = scmp.ne.s32.totalorder %s25, %s27
      %p34 = scmp.eq.s32.totalorder %s22, 1
      %p35 = por %p33, %p34
      %p36 = scmp.ne.s32.totalorder %s27, %s28
      %p37 = scmp.eq.s32.totalorder %s22, 0
      %p38 = por %p36, %p37
      %p39 = scmp.ne.s32.totalorder %s27, %s28
      %p40 = scmp.eq.s32.totalorder %s23, 1
      %p41 = por %p39, %p40
      %p43 = scmp.ne.s32.totalorder %s28, %s42
      %p44 = scmp.eq.s32.totalorder %s23, 0
      %p45 = por %p43, %p44
      %s47 = sadd.s32 %s46, 1
      %p50 = scmp.eq.s32.totalorder %s17, 1
      %p51 = scmp.ne.s32.totalorder %s46, %s48
      %p52 = scmp.eq.s32.totalorder %s17, 0
      %p53 = por %p51, %p52
      %p54 = scmp.ne.s32.totalorder %s46, %s48
      %p55 = scmp.eq.s32.totalorder %s22, 1
      %p56 = por %p54, %p55
      %p57 = scmp.ne.s32.totalorder %s48, %s49
      %p58 = scmp.eq.s32.totalorder %s22, 0
      %p59 = por %p57, %p58
      %p60 = scmp.ne.s32.totalorder %s48, %s49
      %p61 = scmp.eq.s32.totalorder %s23, 1
      %p62 = por %p60, %p61
      %p64 = scmp.ne.s32.totalorder %s49, %s63
      %p65 = scmp.eq.s32.totalorder %s23, 0
      %p66 = por %p64, %p65
      %s67 = ssub.s32 %s17, %s24
      %p68 = scmp.eq.s32.totalorder %s67, 0
      %s70 = sadd.s32 %s69, 1
      %s71 = scalar_select %p68, %s69, %s70
      %p74 = pneg %p68
      %p75 = scmp.eq.s32.totalorder %s17, 1
      %p76 = por %p74, %p75
      %p77 = scmp.ne.s32.totalorder %s69, %s72
      %p78 = scmp.eq.s32.totalorder %s17, 0
      %p79 = por %p77, %p78
      %p80 = scmp.ne.s32.totalorder %s69, %s72
      %p81 = scmp.eq.s32.totalorder %s22, 1
      %p82 = por %p80, %p81
      %p83 = scmp.ne.s32.totalorder %s72, %s73
      %p84 = scmp.eq.s32.totalorder %s22, 0
      %p85 = por %p83, %p84
      %p86 = scmp.ne.s32.totalorder %s72, %s73
      %p87 = scmp.eq.s32.totalorder %s23, 1
      %p88 = por %p86, %p87
      %p90 = scmp.ne.s32.totalorder %s73, %s89
      %p91 = scmp.eq.s32.totalorder %s23, 0
      %p92 = por %p90, %p91
      %s93 = ssub.s32 %s17, %s24
      %p94 = scmp.eq.s32.totalorder %s93, 0
      %s96 = sadd.s32 %s95, 1
      %s97 = scalar_select %p94, %s95, %s96
      %p100 = pneg %p94
      %p101 = scmp.eq.s32.totalorder %s17, 1
      %p102 = por %p100, %p101
      %p103 = scmp.ne.s32.totalorder %s95, %s98
      %p104 = scmp.eq.s32.totalorder %s17, 0
      %p105 = por %p103, %p104
      %p106 = scmp.ne.s32.totalorder %s95, %s98
      %p107 = scmp.eq.s32.totalorder %s22, 1
      %p108 = por %p106, %p107
      %p109 = scmp.ne.s32.totalorder %s98, %s99
      %p110 = scmp.eq.s32.totalorder %s22, 0
      %p111 = por %p109, %p110
      %p112 = scmp.ne.s32.totalorder %s98, %s99
      %p113 = scmp.eq.s32.totalorder %s23, 1
      %p114 = por %p112, %p113
      %p116 = scmp.ne.s32.totalorder %s99, %s115
      %p117 = scmp.eq.s32.totalorder %s23, 0
      %p118 = por %p116, %p117
      %p119 = scmp.le.s32.totalorder 1, %s17
      %p120 = scmp.lt.s32.totalorder %s17, 3
      %p121 = pnand %p119, %p120
      %p122 = pneg %p121
      // Predicated region
      $region9: #{tpu_custom_call.1} parent=5 // pred_check
        _
      $region10: #{tpu_custom_call.1} parent=5 // pred_check_branch
        %124 = sbr.rel (%p121) target = $region12
      $region11: #{tpu_custom_call.1} parent=5 // pred_region
        %s125 = ssub.s32 %s17, 1
        // Predicated region
        $region13: #{tpu_custom_call.1} parent=11 // pred_check
          %p126 = pneg %p38
        $region14: #{tpu_custom_call.1} parent=11 // pred_check_branch
          %128 = sbr.rel (%p126) target = $region16
        $region15: #{tpu_custom_call.1} parent=11 // pred_region
          _
        $region16: #{tpu_custom_call.1} parent=11 // pred_fallthru
          _
        // Predicated region
        $region17: #{tpu_custom_call.1} parent=11 // pred_check
          %p129 = pneg %p59
        $region18: #{tpu_custom_call.1} parent=11 // pred_check_branch
          %131 = sbr.rel (%p129) target = $region20
        $region19: #{tpu_custom_call.1} parent=11 // pred_region
          _
        $region20: #{tpu_custom_call.1} parent=11 // pred_fallthru
          _
      $region12: #{tpu_custom_call.1} parent=5 // pred_fallthru
        _
      %p132 = scmp.lt.s32.totalorder %s17, 2
      // Predicated region
      $region21: #{tpu_custom_call.1} parent=5 // pred_check
        %p133 = pneg %p132
      $region22: #{tpu_custom_call.1} parent=5 // pred_check_branch
        %135 = sbr.rel (%p133) target = $region24
      $region23: #{tpu_custom_call.1} parent=5 // pred_region
        // Predicated region
        $region25: #{tpu_custom_call.1} parent=23 // pred_check
          %p136 = pneg %p79
        $region26: #{tpu_custom_call.1} parent=23 // pred_check_branch
          %138 = sbr.rel (%p136) target = $region28
        $region27: #{tpu_custom_call.1} parent=23 // pred_region
          %s139 = sand.u32 %s69, 1
          %s140 = scalar_lea.sflag [#allocation5], %s139
          %s141 = sand.u32 %s69, 1
          %s142 = smul.addr %s141, 3456
          %s143 = scalar_lea.vmem [#allocation4], %s142
          %s144 = smul.u32 54, %s17
          %s146 = ssub.s32 55296, 55296
          %147 = vsyncadd %s140, %s146
          %s148 = smul.addr %s144, 8
          %s149 = smul.addr %s148, 128
          %s150 = scalar_lea.hbm %s2, %s149
          %s151 = sshll.u32 %s143, 4
          %s152 = int_to_ptr.vmem [resolvable:$true] %s151
          %157 = dma.hbm_to_vmem [thread:$0]  %s150, 55296, %s152, %s140, 1024, 1024, 64
        $region28: #{tpu_custom_call.1} parent=23 // pred_fallthru
          _
      $region24: #{tpu_custom_call.1} parent=5 // pred_fallthru
        _
      %p158 = scmp.le.s32.totalorder 1, %s17
      %p159 = scmp.lt.s32.totalorder %s17, 3
      %p160 = pnand %p158, %p159
      %p161 = pneg %p160
      // Predicated region
      $region29: #{tpu_custom_call.1} parent=5 // pred_check
        _
      $region30: #{tpu_custom_call.1} parent=5 // pred_check_branch
        %163 = sbr.rel (%p160) target = $region32
      $region31: #{tpu_custom_call.1} parent=5 // pred_region
        %s164 = ssub.s32 %s17, 1
        %s165 = sand.u32 %s72, 1
        %s166 = scalar_lea.sflag [#allocation5], %s165
        %s167 = sand.u32 %s72, 1
        %s168 = smul.addr %s167, 3456
        %s169 = scalar_lea.vmem [#allocation4], %s168
        // Predicated region
        $region33: #{tpu_custom_call.1} parent=31 // pred_check
          %p170 = pneg %p85
        $region34: #{tpu_custom_call.1} parent=31 // pred_check_branch
          %172 = sbr.rel (%p170) target = $region36
        $region35: #{tpu_custom_call.1} parent=31 // pred_region
          %173 = dma.done %s166, 55296
        $region36: #{tpu_custom_call.1} parent=31 // pred_fallthru
          _
        %p174 = pneg %p38
        %p175 = pneg %p35
        %p176 = pneg %p59
        %p177 = pneg %p56
        %s178 = sand.u32 %s72, 1
        %s179 = scalar_lea.sflag [#allocation5], %s178
        %s180 = sand.u32 %s72, 1
        %s181 = smul.addr %s180, 3456
        %s182 = scalar_lea.vmem [#allocation4], %s181
        %p183 = pneg %p85
        %p184 = pneg %p82
        %p185 = pneg %p111
        %p186 = pneg %p108
        %s187 = sand.u32 %s98, 1
        %s188 = scalar_lea.sflag [#allocation6], %s187
        %s189 = sand.u32 %s98, 1
        %s190 = smul.addr %s189, 3456
        %s191 = scalar_lea.vmem [#allocation7], %s190
        %s192 = smul.u32 54, %s22
        %s193 = smul.u32 54, %s22
        %v194 = vld [vmem:[%s169] sm:$0xff]
        %v195 = vld [vmem:[%s169 + $0x8] sm:$0xff]
        %v196 = vld [vmem:[%s169 + $0x10] sm:$0xff]
        %v197 = vld [vmem:[%s169 + $0x18] sm:$0xff]
        %v198 = vld [vmem:[%s169 + $0x20] sm:$0xff]
        %v199 = vld [vmem:[%s169 + $0x28] sm:$0xff]
        %v200 = vld [vmem:[%s169 + $0x30] sm:$0xff]
        %v201 = vld [vmem:[%s169 + $0x38] sm:$0xff]
        %v202 = vld [vmem:[%s169 + $0x40] sm:$0xff]
        %v203 = vld [vmem:[%s169 + $0x48] sm:$0xff]
        %v204 = vld [vmem:[%s169 + $0x50] sm:$0xff]
        %v205 = vld [vmem:[%s169 + $0x58] sm:$0xff]
        %v206 = vld [vmem:[%s169 + $0x60] sm:$0xff]
        %v207 = vld [vmem:[%s169 + $0x68] sm:$0xff]
        %v208 = vld [vmem:[%s169 + $0x70] sm:$0xff]
        %v209 = vld [vmem:[%s169 + $0x78] sm:$0xff]
        %v210 = vld [vmem:[%s169 + $0x80] sm:$0xff]
        %v211 = vld [vmem:[%s169 + $0x88] sm:$0xff]
        %v212 = vld [vmem:[%s169 + $0x90] sm:$0xff]
        %v213 = vld [vmem:[%s169 + $0x98] sm:$0xff]
        %v214 = vld [vmem:[%s169 + $0xa0] sm:$0xff]
        %v215 = vld [vmem:[%s169 + $0xa8] sm:$0xff]
        %v216 = vld [vmem:[%s169 + $0xb0] sm:$0xff]
        %v217 = vld [vmem:[%s169 + $0xb8] sm:$0xff]
        %v218 = vld [vmem:[%s169 + $0xc0] sm:$0xff]
        %v219 = vld [vmem:[%s169 + $0xc8] sm:$0xff]
        %v220 = vld [vmem:[%s169 + $0xd0] sm:$0xff]
        %v221 = vld [vmem:[%s169 + $0xd8] sm:$0xff]
        %v222 = vld [vmem:[%s169 + $0xe0] sm:$0xff]
        %v223 = vld [vmem:[%s169 + $0xe8] sm:$0xff]
        %v224 = vld [vmem:[%s169 + $0xf0] sm:$0xff]
        %v225 = vld [vmem:[%s169 + $0xf8] sm:$0xff]
        %v226 = vld [vmem:[%s169 + $0x100] sm:$0xff]
        %v227 = vld [vmem:[%s169 + $0x108] sm:$0xff]
        %v228 = vld [vmem:[%s169 + $0x110] sm:$0xff]
        %v229 = vld [vmem:[%s169 + $0x118] sm:$0xff]
        %v230 = vld [vmem:[%s169 + $0x120] sm:$0xff]
        %v231 = vld [vmem:[%s169 + $0x128] sm:$0xff]
        %v232 = vld [vmem:[%s169 + $0x130] sm:$0xff]
        %v233 = vld [vmem:[%s169 + $0x138] sm:$0xff]
        %v234 = vld [vmem:[%s169 + $0x140] sm:$0xff]
        %v235 = vld [vmem:[%s169 + $0x148] sm:$0xff]
        %v236 = vld [vmem:[%s169 + $0x150] sm:$0xff]
        %v237 = vld [vmem:[%s169 + $0x158] sm:$0xff]
        %v238 = vld [vmem:[%s169 + $0x160] sm:$0xff]
        %v239 = vld [vmem:[%s169 + $0x168] sm:$0xff]
        %v240 = vld [vmem:[%s169 + $0x170] sm:$0xff]
        %v241 = vld [vmem:[%s169 + $0x178] sm:$0xff]
        %v242 = vld [vmem:[%s169 + $0x180] sm:$0xff]
        %v243 = vld [vmem:[%s169 + $0x188] sm:$0xff]
        %v244 = vld [vmem:[%s169 + $0x190] sm:$0xff]
        %v245 = vld [vmem:[%s169 + $0x198] sm:$0xff]
        %v246 = vld [vmem:[%s169 + $0x1a0] sm:$0xff]
        %v247 = vld [vmem:[%s169 + $0x1a8] sm:$0xff]
        %v248 = vld [vmem:[%s169 + $0x1b0] sm:$0xff]
        %v249 = vld [vmem:[%s169 + $0x1b8] sm:$0xff]
        %v250 = vld [vmem:[%s169 + $0x1c0] sm:$0xff]
        %v251 = vld [vmem:[%s169 + $0x1c8] sm:$0xff]
        %v252 = vld [vmem:[%s169 + $0x1d0] sm:$0xff]
        %v253 = vld [vmem:[%s169 + $0x1d8] sm:$0xff]
        %v254 = vld [vmem:[%s169 + $0x1e0] sm:$0xff]
        %v255 = vld [vmem:[%s169 + $0x1e8] sm:$0xff]
        %v256 = vld [vmem:[%s169 + $0x1f0] sm:$0xff]
        %v257 = vld [vmem:[%s169 + $0x1f8] sm:$0xff]
        %v258 = vld [vmem:[%s169 + $0x200] sm:$0xff]
        %v259 = vld [vmem:[%s169 + $0x208] sm:$0xff]
        %v260 = vld [vmem:[%s169 + $0x210] sm:$0xff]
        %v261 = vld [vmem:[%s169 + $0x218] sm:$0xff]
        %v262 = vld [vmem:[%s169 + $0x220] sm:$0xff]
        %v263 = vld [vmem:[%s169 + $0x228] sm:$0xff]
        %v264 = vld [vmem:[%s169 + $0x230] sm:$0xff]
        %v265 = vld [vmem:[%s169 + $0x238] sm:$0xff]
        %v266 = vld [vmem:[%s169 + $0x240] sm:$0xff]
        %v267 = vld [vmem:[%s169 + $0x248] sm:$0xff]
        %v268 = vld [vmem:[%s169 + $0x250] sm:$0xff]
        %v269 = vld [vmem:[%s169 + $0x258] sm:$0xff]
        %v270 = vld [vmem:[%s169 + $0x260] sm:$0xff]
        %v271 = vld [vmem:[%s169 + $0x268] sm:$0xff]
        %v272 = vld [vmem:[%s169 + $0x270] sm:$0xff]
        %v273 = vld [vmem:[%s169 + $0x278] sm:$0xff]
        %v274 = vld [vmem:[%s169 + $0x280] sm:$0xff]
        %v275 = vld [vmem:[%s169 + $0x288] sm:$0xff]
        %v276 = vld [vmem:[%s169 + $0x290] sm:$0xff]
        %v277 = vld [vmem:[%s169 + $0x298] sm:$0xff]
        %v278 = vld [vmem:[%s169 + $0x2a0] sm:$0xff]
        %v279 = vld [vmem:[%s169 + $0x2a8] sm:$0xff]
        %v280 = vld [vmem:[%s169 + $0x2b0] sm:$0xff]
        %v281 = vld [vmem:[%s169 + $0x2b8] sm:$0xff]
        %v282 = vld [vmem:[%s169 + $0x2c0] sm:$0xff]
        %v283 = vld [vmem:[%s169 + $0x2c8] sm:$0xff]
        %v284 = vld [vmem:[%s169 + $0x2d0] sm:$0xff]
        %v285 = vld [vmem:[%s169 + $0x2d8] sm:$0xff]
        %v286 = vld [vmem:[%s169 + $0x2e0] sm:$0xff]
        %v287 = vld [vmem:[%s169 + $0x2e8] sm:$0xff]
        %v288 = vld [vmem:[%s169 + $0x2f0] sm:$0xff]
        %v289 = vld [vmem:[%s169 + $0x2f8] sm:$0xff]
        %v290 = vld [vmem:[%s169 + $0x300] sm:$0xff]
        %v291 = vld [vmem:[%s169 + $0x308] sm:$0xff]
        %v292 = vld [vmem:[%s169 + $0x310] sm:$0xff]
        %v293 = vld [vmem:[%s169 + $0x318] sm:$0xff]
        %v294 = vld [vmem:[%s169 + $0x320] sm:$0xff]
        %v295 = vld [vmem:[%s169 + $0x328] sm:$0xff]
        %v296 = vld [vmem:[%s169 + $0x330] sm:$0xff]
        %v297 = vld [vmem:[%s169 + $0x338] sm:$0xff]
        %v298 = vld [vmem:[%s169 + $0x340] sm:$0xff]
        %v299 = vld [vmem:[%s169 + $0x348] sm:$0xff]
        %v300 = vld [vmem:[%s169 + $0x350] sm:$0xff]
        %v301 = vld [vmem:[%s169 + $0x358] sm:$0xff]
        %v302 = vld [vmem:[%s169 + $0x360] sm:$0xff]
        %v303 = vld [vmem:[%s169 + $0x368] sm:$0xff]
        %v304 = vld [vmem:[%s169 + $0x370] sm:$0xff]
        %v305 = vld [vmem:[%s169 + $0x378] sm:$0xff]
        %v306 = vld [vmem:[%s169 + $0x380] sm:$0xff]
        %v307 = vld [vmem:[%s169 + $0x388] sm:$0xff]
        %v308 = vld [vmem:[%s169 + $0x390] sm:$0xff]
        %v309 = vld [vmem:[%s169 + $0x398] sm:$0xff]
        %v310 = vld [vmem:[%s169 + $0x3a0] sm:$0xff]
        %v311 = vld [vmem:[%s169 + $0x3a8] sm:$0xff]
        %v312 = vld [vmem:[%s169 + $0x3b0] sm:$0xff]
        %v313 = vld [vmem:[%s169 + $0x3b8] sm:$0xff]
        %v314 = vld [vmem:[%s169 + $0x3c0] sm:$0xff]
        %v315 = vld [vmem:[%s169 + $0x3c8] sm:$0xff]
        %v316 = vld [vmem:[%s169 + $0x3d0] sm:$0xff]
        %v317 = vld [vmem:[%s169 + $0x3d8] sm:$0xff]
        %v318 = vld [vmem:[%s169 + $0x3e0] sm:$0xff]
        %v319 = vld [vmem:[%s169 + $0x3e8] sm:$0xff]
        %v320 = vld [vmem:[%s169 + $0x3f0] sm:$0xff]
        %v321 = vld [vmem:[%s169 + $0x3f8] sm:$0xff]
        %v322 = vld [vmem:[%s169 + $0x400] sm:$0xff]
        %v323 = vld [vmem:[%s169 + $0x408] sm:$0xff]
        %v324 = vld [vmem:[%s169 + $0x410] sm:$0xff]
        %v325 = vld [vmem:[%s169 + $0x418] sm:$0xff]
        %v326 = vld [vmem:[%s169 + $0x420] sm:$0xff]
        %v327 = vld [vmem:[%s169 + $0x428] sm:$0xff]
        %v328 = vld [vmem:[%s169 + $0x430] sm:$0xff]
        %v329 = vld [vmem:[%s169 + $0x438] sm:$0xff]
        %v330 = vld [vmem:[%s169 + $0x440] sm:$0xff]
        %v331 = vld [vmem:[%s169 + $0x448] sm:$0xff]
        %v332 = vld [vmem:[%s169 + $0x450] sm:$0xff]
        %v333 = vld [vmem:[%s169 + $0x458] sm:$0xff]
        %v334 = vld [vmem:[%s169 + $0x460] sm:$0xff]
        %v335 = vld [vmem:[%s169 + $0x468] sm:$0xff]
        %v336 = vld [vmem:[%s169 + $0x470] sm:$0xff]
        %v337 = vld [vmem:[%s169 + $0x478] sm:$0xff]
        %v338 = vld [vmem:[%s169 + $0x480] sm:$0xff]
        %v339 = vld [vmem:[%s169 + $0x488] sm:$0xff]
        %v340 = vld [vmem:[%s169 + $0x490] sm:$0xff]
        %v341 = vld [vmem:[%s169 + $0x498] sm:$0xff]
        %v342 = vld [vmem:[%s169 + $0x4a0] sm:$0xff]
        %v343 = vld [vmem:[%s169 + $0x4a8] sm:$0xff]
        %v344 = vld [vmem:[%s169 + $0x4b0] sm:$0xff]
        %v345 = vld [vmem:[%s169 + $0x4b8] sm:$0xff]
        %v346 = vld [vmem:[%s169 + $0x4c0] sm:$0xff]
        %v347 = vld [vmem:[%s169 + $0x4c8] sm:$0xff]
        %v348 = vld [vmem:[%s169 + $0x4d0] sm:$0xff]
        %v349 = vld [vmem:[%s169 + $0x4d8] sm:$0xff]
        %v350 = vld [vmem:[%s169 + $0x4e0] sm:$0xff]
        %v351 = vld [vmem:[%s169 + $0x4e8] sm:$0xff]
        %v352 = vld [vmem:[%s169 + $0x4f0] sm:$0xff]
        %v353 = vld [vmem:[%s169 + $0x4f8] sm:$0xff]
        %v354 = vld [vmem:[%s169 + $0x500] sm:$0xff]
        %v355 = vld [vmem:[%s169 + $0x508] sm:$0xff]
        %v356 = vld [vmem:[%s169 + $0x510] sm:$0xff]
        %v357 = vld [vmem:[%s169 + $0x518] sm:$0xff]
        %v358 = vld [vmem:[%s169 + $0x520] sm:$0xff]
        %v359 = vld [vmem:[%s169 + $0x528] sm:$0xff]
        %v360 = vld [vmem:[%s169 + $0x530] sm:$0xff]
        %v361 = vld [vmem:[%s169 + $0x538] sm:$0xff]
        %v362 = vld [vmem:[%s169 + $0x540] sm:$0xff]
        %v363 = vld [vmem:[%s169 + $0x548] sm:$0xff]
        %v364 = vld [vmem:[%s169 + $0x550] sm:$0xff]
        %v365 = vld [vmem:[%s169 + $0x558] sm:$0xff]
        %v366 = vld [vmem:[%s169 + $0x560] sm:$0xff]
        %v367 = vld [vmem:[%s169 + $0x568] sm:$0xff]
        %v368 = vld [vmem:[%s169 + $0x570] sm:$0xff]
        %v369 = vld [vmem:[%s169 + $0x578] sm:$0xff]
        %v370 = vld [vmem:[%s169 + $0x580] sm:$0xff]
        %v371 = vld [vmem:[%s169 + $0x588] sm:$0xff]
        %v372 = vld [vmem:[%s169 + $0x590] sm:$0xff]
        %v373 = vld [vmem:[%s169 + $0x598] sm:$0xff]
        %v374 = vld [vmem:[%s169 + $0x5a0] sm:$0xff]
        %v375 = vld [vmem:[%s169 + $0x5a8] sm:$0xff]
        %v376 = vld [vmem:[%s169 + $0x5b0] sm:$0xff]
        %v377 = vld [vmem:[%s169 + $0x5b8] sm:$0xff]
        %v378 = vld [vmem:[%s169 + $0x5c0] sm:$0xff]
        %v379 = vld [vmem:[%s169 + $0x5c8] sm:$0xff]
        %v380 = vld [vmem:[%s169 + $0x5d0] sm:$0xff]
        %v381 = vld [vmem:[%s169 + $0x5d8] sm:$0xff]
        %v382 = vld [vmem:[%s169 + $0x5e0] sm:$0xff]
        %v383 = vld [vmem:[%s169 + $0x5e8] sm:$0xff]
        %v384 = vld [vmem:[%s169 + $0x5f0] sm:$0xff]
        %v385 = vld [vmem:[%s169 + $0x5f8] sm:$0xff]
        %v386 = vld [vmem:[%s169 + $0x600] sm:$0xff]
        %v387 = vld [vmem:[%s169 + $0x608] sm:$0xff]
        %v388 = vld [vmem:[%s169 + $0x610] sm:$0xff]
        %v389 = vld [vmem:[%s169 + $0x618] sm:$0xff]
        %v390 = vld [vmem:[%s169 + $0x620] sm:$0xff]
        %v391 = vld [vmem:[%s169 + $0x628] sm:$0xff]
        %v392 = vld [vmem:[%s169 + $0x630] sm:$0xff]
        %v393 = vld [vmem:[%s169 + $0x638] sm:$0xff]
        %v394 = vld [vmem:[%s169 + $0x640] sm:$0xff]
        %v395 = vld [vmem:[%s169 + $0x648] sm:$0xff]
        %v396 = vld [vmem:[%s169 + $0x650] sm:$0xff]
        %v397 = vld [vmem:[%s169 + $0x658] sm:$0xff]
        %v398 = vld [vmem:[%s169 + $0x660] sm:$0xff]
        %v399 = vld [vmem:[%s169 + $0x668] sm:$0xff]
        %v400 = vld [vmem:[%s169 + $0x670] sm:$0xff]
        %v401 = vld [vmem:[%s169 + $0x678] sm:$0xff]
        %v402 = vld [vmem:[%s169 + $0x680] sm:$0xff]
        %v403 = vld [vmem:[%s169 + $0x688] sm:$0xff]
        %v404 = vld [vmem:[%s169 + $0x690] sm:$0xff]
        %v405 = vld [vmem:[%s169 + $0x698] sm:$0xff]
        %v406 = vld [vmem:[%s169 + $0x6a0] sm:$0xff]
        %v407 = vld [vmem:[%s169 + $0x6a8] sm:$0xff]
        %v408 = vld [vmem:[%s169 + $0x6b0] sm:$0xff]
        %v409 = vld [vmem:[%s169 + $0x6b8] sm:$0xff]
        %v410 = vld [vmem:[%s169 + $0x6c0] sm:$0xff]
        %v411 = vld [vmem:[%s169 + $0x6c8] sm:$0xff]
        %v412 = vld [vmem:[%s169 + $0x6d0] sm:$0xff]
        %v413 = vld [vmem:[%s169 + $0x6d8] sm:$0xff]
        %v414 = vld [vmem:[%s169 + $0x6e0] sm:$0xff]
        %v415 = vld [vmem:[%s169 + $0x6e8] sm:$0xff]
        %v416 = vld [vmem:[%s169 + $0x6f0] sm:$0xff]
        %v417 = vld [vmem:[%s169 + $0x6f8] sm:$0xff]
        %v418 = vld [vmem:[%s169 + $0x700] sm:$0xff]
        %v419 = vld [vmem:[%s169 + $0x708] sm:$0xff]
        %v420 = vld [vmem:[%s169 + $0x710] sm:$0xff]
        %v421 = vld [vmem:[%s169 + $0x718] sm:$0xff]
        %v422 = vld [vmem:[%s169 + $0x720] sm:$0xff]
        %v423 = vld [vmem:[%s169 + $0x728] sm:$0xff]
        %v424 = vld [vmem:[%s169 + $0x730] sm:$0xff]
        %v425 = vld [vmem:[%s169 + $0x738] sm:$0xff]
        %v426 = vld [vmem:[%s169 + $0x740] sm:$0xff]
        %v427 = vld [vmem:[%s169 + $0x748] sm:$0xff]
        %v428 = vld [vmem:[%s169 + $0x750] sm:$0xff]
        %v429 = vld [vmem:[%s169 + $0x758] sm:$0xff]
        %v430 = vld [vmem:[%s169 + $0x760] sm:$0xff]
        %v431 = vld [vmem:[%s169 + $0x768] sm:$0xff]
        %v432 = vld [vmem:[%s169 + $0x770] sm:$0xff]
        %v433 = vld [vmem:[%s169 + $0x778] sm:$0xff]
        %v434 = vld [vmem:[%s169 + $0x780] sm:$0xff]
        %v435 = vld [vmem:[%s169 + $0x788] sm:$0xff]
        %v436 = vld [vmem:[%s169 + $0x790] sm:$0xff]
        %v437 = vld [vmem:[%s169 + $0x798] sm:$0xff]
        %v438 = vld [vmem:[%s169 + $0x7a0] sm:$0xff]
        %v439 = vld [vmem:[%s169 + $0x7a8] sm:$0xff]
        %v440 = vld [vmem:[%s169 + $0x7b0] sm:$0xff]
        %v441 = vld [vmem:[%s169 + $0x7b8] sm:$0xff]
        %v442 = vld [vmem:[%s169 + $0x7c0] sm:$0xff]
        %v443 = vld [vmem:[%s169 + $0x7c8] sm:$0xff]
        %v444 = vld [vmem:[%s169 + $0x7d0] sm:$0xff]
        %v445 = vld [vmem:[%s169 + $0x7d8] sm:$0xff]
        %v446 = vld [vmem:[%s169 + $0x7e0] sm:$0xff]
        %v447 = vld [vmem:[%s169 + $0x7e8] sm:$0xff]
        %v448 = vld [vmem:[%s169 + $0x7f0] sm:$0xff]
        %v449 = vld [vmem:[%s169 + $0x7f8] sm:$0xff]
        %v450 = vld [vmem:[%s169 + $0x800] sm:$0xff]
        %v451 = vld [vmem:[%s169 + $0x808] sm:$0xff]
        %v452 = vld [vmem:[%s169 + $0x810] sm:$0xff]
        %v453 = vld [vmem:[%s169 + $0x818] sm:$0xff]
        %v454 = vld [vmem:[%s169 + $0x820] sm:$0xff]
        %v455 = vld [vmem:[%s169 + $0x828] sm:$0xff]
        %v456 = vld [vmem:[%s169 + $0x830] sm:$0xff]
        %v457 = vld [vmem:[%s169 + $0x838] sm:$0xff]
        %v458 = vld [vmem:[%s169 + $0x840] sm:$0xff]
        %v459 = vld [vmem:[%s169 + $0x848] sm:$0xff]
        %v460 = vld [vmem:[%s169 + $0x850] sm:$0xff]
        %v461 = vld [vmem:[%s169 + $0x858] sm:$0xff]
        %v462 = vld [vmem:[%s169 + $0x860] sm:$0xff]
        %v463 = vld [vmem:[%s169 + $0x868] sm:$0xff]
        %v464 = vld [vmem:[%s169 + $0x870] sm:$0xff]
        %v465 = vld [vmem:[%s169 + $0x878] sm:$0xff]
        %v466 = vld [vmem:[%s169 + $0x880] sm:$0xff]
        %v467 = vld [vmem:[%s169 + $0x888] sm:$0xff]
        %v468 = vld [vmem:[%s169 + $0x890] sm:$0xff]
        %v469 = vld [vmem:[%s169 + $0x898] sm:$0xff]
        %v470 = vld [vmem:[%s169 + $0x8a0] sm:$0xff]
        %v471 = vld [vmem:[%s169 + $0x8a8] sm:$0xff]
        %v472 = vld [vmem:[%s169 + $0x8b0] sm:$0xff]
        %v473 = vld [vmem:[%s169 + $0x8b8] sm:$0xff]
        %v474 = vld [vmem:[%s169 + $0x8c0] sm:$0xff]
        %v475 = vld [vmem:[%s169 + $0x8c8] sm:$0xff]
        %v476 = vld [vmem:[%s169 + $0x8d0] sm:$0xff]
        %v477 = vld [vmem:[%s169 + $0x8d8] sm:$0xff]
        %v478 = vld [vmem:[%s169 + $0x8e0] sm:$0xff]
        %v479 = vld [vmem:[%s169 + $0x8e8] sm:$0xff]
        %v480 = vld [vmem:[%s169 + $0x8f0] sm:$0xff]
        %v481 = vld [vmem:[%s169 + $0x8f8] sm:$0xff]
        %v482 = vld [vmem:[%s169 + $0x900] sm:$0xff]
        %v483 = vld [vmem:[%s169 + $0x908] sm:$0xff]
        %v484 = vld [vmem:[%s169 + $0x910] sm:$0xff]
        %v485 = vld [vmem:[%s169 + $0x918] sm:$0xff]
        %v486 = vld [vmem:[%s169 + $0x920] sm:$0xff]
        %v487 = vld [vmem:[%s169 + $0x928] sm:$0xff]
        %v488 = vld [vmem:[%s169 + $0x930] sm:$0xff]
        %v489 = vld [vmem:[%s169 + $0x938] sm:$0xff]
        %v490 = vld [vmem:[%s169 + $0x940] sm:$0xff]
        %v491 = vld [vmem:[%s169 + $0x948] sm:$0xff]
        %v492 = vld [vmem:[%s169 + $0x950] sm:$0xff]
        %v493 = vld [vmem:[%s169 + $0x958] sm:$0xff]
        %v494 = vld [vmem:[%s169 + $0x960] sm:$0xff]
        %v495 = vld [vmem:[%s169 + $0x968] sm:$0xff]
        %v496 = vld [vmem:[%s169 + $0x970] sm:$0xff]
        %v497 = vld [vmem:[%s169 + $0x978] sm:$0xff]
        %v498 = vld [vmem:[%s169 + $0x980] sm:$0xff]
        %v499 = vld [vmem:[%s169 + $0x988] sm:$0xff]
        %v500 = vld [vmem:[%s169 + $0x990] sm:$0xff]
        %v501 = vld [vmem:[%s169 + $0x998] sm:$0xff]
        %v502 = vld [vmem:[%s169 + $0x9a0] sm:$0xff]
        %v503 = vld [vmem:[%s169 + $0x9a8] sm:$0xff]
        %v504 = vld [vmem:[%s169 + $0x9b0] sm:$0xff]
        %v505 = vld [vmem:[%s169 + $0x9b8] sm:$0xff]
        %v506 = vld [vmem:[%s169 + $0x9c0] sm:$0xff]
        %v507 = vld [vmem:[%s169 + $0x9c8] sm:$0xff]
        %v508 = vld [vmem:[%s169 + $0x9d0] sm:$0xff]
        %v509 = vld [vmem:[%s169 + $0x9d8] sm:$0xff]
        %v510 = vld [vmem:[%s169 + $0x9e0] sm:$0xff]
        %v511 = vld [vmem:[%s169 + $0x9e8] sm:$0xff]
        %v512 = vld [vmem:[%s169 + $0x9f0] sm:$0xff]
        %v513 = vld [vmem:[%s169 + $0x9f8] sm:$0xff]
        %v514 = vld [vmem:[%s169 + $0xa00] sm:$0xff]
        %v515 = vld [vmem:[%s169 + $0xa08] sm:$0xff]
        %v516 = vld [vmem:[%s169 + $0xa10] sm:$0xff]
        %v517 = vld [vmem:[%s169 + $0xa18] sm:$0xff]
        %v518 = vld [vmem:[%s169 + $0xa20] sm:$0xff]
        %v519 = vld [vmem:[%s169 + $0xa28] sm:$0xff]
        %v520 = vld [vmem:[%s169 + $0xa30] sm:$0xff]
        %v521 = vld [vmem:[%s169 + $0xa38] sm:$0xff]
        %v522 = vld [vmem:[%s169 + $0xa40] sm:$0xff]
        %v523 = vld [vmem:[%s169 + $0xa48] sm:$0xff]
        %v524 = vld [vmem:[%s169 + $0xa50] sm:$0xff]
        %v525 = vld [vmem:[%s169 + $0xa58] sm:$0xff]
        %v526 = vld [vmem:[%s169 + $0xa60] sm:$0xff]
        %v527 = vld [vmem:[%s169 + $0xa68] sm:$0xff]
        %v528 = vld [vmem:[%s169 + $0xa70] sm:$0xff]
        %v529 = vld [vmem:[%s169 + $0xa78] sm:$0xff]
        %v530 = vld [vmem:[%s169 + $0xa80] sm:$0xff]
        %v531 = vld [vmem:[%s169 + $0xa88] sm:$0xff]
        %v532 = vld [vmem:[%s169 + $0xa90] sm:$0xff]
        %v533 = vld [vmem:[%s169 + $0xa98] sm:$0xff]
        %v534 = vld [vmem:[%s169 + $0xaa0] sm:$0xff]
        %v535 = vld [vmem:[%s169 + $0xaa8] sm:$0xff]
        %v536 = vld [vmem:[%s169 + $0xab0] sm:$0xff]
        %v537 = vld [vmem:[%s169 + $0xab8] sm:$0xff]
        %v538 = vld [vmem:[%s169 + $0xac0] sm:$0xff]
        %v539 = vld [vmem:[%s169 + $0xac8] sm:$0xff]
        %v540 = vld [vmem:[%s169 + $0xad0] sm:$0xff]
        %v541 = vld [vmem:[%s169 + $0xad8] sm:$0xff]
        %v542 = vld [vmem:[%s169 + $0xae0] sm:$0xff]
        %v543 = vld [vmem:[%s169 + $0xae8] sm:$0xff]
        %v544 = vld [vmem:[%s169 + $0xaf0] sm:$0xff]
        %v545 = vld [vmem:[%s169 + $0xaf8] sm:$0xff]
        %v546 = vld [vmem:[%s169 + $0xb00] sm:$0xff]
        %v547 = vld [vmem:[%s169 + $0xb08] sm:$0xff]
        %v548 = vld [vmem:[%s169 + $0xb10] sm:$0xff]
        %v549 = vld [vmem:[%s169 + $0xb18] sm:$0xff]
        %v550 = vld [vmem:[%s169 + $0xb20] sm:$0xff]
        %v551 = vld [vmem:[%s169 + $0xb28] sm:$0xff]
        %v552 = vld [vmem:[%s169 + $0xb30] sm:$0xff]
        %v553 = vld [vmem:[%s169 + $0xb38] sm:$0xff]
        %v554 = vld [vmem:[%s169 + $0xb40] sm:$0xff]
        %v555 = vld [vmem:[%s169 + $0xb48] sm:$0xff]
        %v556 = vld [vmem:[%s169 + $0xb50] sm:$0xff]
        %v557 = vld [vmem:[%s169 + $0xb58] sm:$0xff]
        %v558 = vld [vmem:[%s169 + $0xb60] sm:$0xff]
        %v559 = vld [vmem:[%s169 + $0xb68] sm:$0xff]
        %v560 = vld [vmem:[%s169 + $0xb70] sm:$0xff]
        %v561 = vld [vmem:[%s169 + $0xb78] sm:$0xff]
        %v562 = vld [vmem:[%s169 + $0xb80] sm:$0xff]
        %v563 = vld [vmem:[%s169 + $0xb88] sm:$0xff]
        %v564 = vld [vmem:[%s169 + $0xb90] sm:$0xff]
        %v565 = vld [vmem:[%s169 + $0xb98] sm:$0xff]
        %v566 = vld [vmem:[%s169 + $0xba0] sm:$0xff]
        %v567 = vld [vmem:[%s169 + $0xba8] sm:$0xff]
        %v568 = vld [vmem:[%s169 + $0xbb0] sm:$0xff]
        %v569 = vld [vmem:[%s169 + $0xbb8] sm:$0xff]
        %v570 = vld [vmem:[%s169 + $0xbc0] sm:$0xff]
        %v571 = vld [vmem:[%s169 + $0xbc8] sm:$0xff]
        %v572 = vld [vmem:[%s169 + $0xbd0] sm:$0xff]
        %v573 = vld [vmem:[%s169 + $0xbd8] sm:$0xff]
        %v574 = vld [vmem:[%s169 + $0xbe0] sm:$0xff]
        %v575 = vld [vmem:[%s169 + $0xbe8] sm:$0xff]
        %v576 = vld [vmem:[%s169 + $0xbf0] sm:$0xff]
        %v577 = vld [vmem:[%s169 + $0xbf8] sm:$0xff]
        %v578 = vld [vmem:[%s169 + $0xc00] sm:$0xff]
        %v579 = vld [vmem:[%s169 + $0xc08] sm:$0xff]
        %v580 = vld [vmem:[%s169 + $0xc10] sm:$0xff]
        %v581 = vld [vmem:[%s169 + $0xc18] sm:$0xff]
        %v582 = vld [vmem:[%s169 + $0xc20] sm:$0xff]
        %v583 = vld [vmem:[%s169 + $0xc28] sm:$0xff]
        %v584 = vld [vmem:[%s169 + $0xc30] sm:$0xff]
        %v585 = vld [vmem:[%s169 + $0xc38] sm:$0xff]
        %v586 = vld [vmem:[%s169 + $0xc40] sm:$0xff]
        %v587 = vld [vmem:[%s169 + $0xc48] sm:$0xff]
        %v588 = vld [vmem:[%s169 + $0xc50] sm:$0xff]
        %v589 = vld [vmem:[%s169 + $0xc58] sm:$0xff]
        %v590 = vld [vmem:[%s169 + $0xc60] sm:$0xff]
        %v591 = vld [vmem:[%s169 + $0xc68] sm:$0xff]
        %v592 = vld [vmem:[%s169 + $0xc70] sm:$0xff]
        %v593 = vld [vmem:[%s169 + $0xc78] sm:$0xff]
        %v594 = vld [vmem:[%s169 + $0xc80] sm:$0xff]
        %v595 = vld [vmem:[%s169 + $0xc88] sm:$0xff]
        %v596 = vld [vmem:[%s169 + $0xc90] sm:$0xff]
        %v597 = vld [vmem:[%s169 + $0xc98] sm:$0xff]
        %v598 = vld [vmem:[%s169 + $0xca0] sm:$0xff]
        %v599 = vld [vmem:[%s169 + $0xca8] sm:$0xff]
        %v600 = vld [vmem:[%s169 + $0xcb0] sm:$0xff]
        %v601 = vld [vmem:[%s169 + $0xcb8] sm:$0xff]
        %v602 = vld [vmem:[%s169 + $0xcc0] sm:$0xff]
        %v603 = vld [vmem:[%s169 + $0xcc8] sm:$0xff]
        %v604 = vld [vmem:[%s169 + $0xcd0] sm:$0xff]
        %v605 = vld [vmem:[%s169 + $0xcd8] sm:$0xff]
        %v606 = vld [vmem:[%s169 + $0xce0] sm:$0xff]
        %v607 = vld [vmem:[%s169 + $0xce8] sm:$0xff]
        %v608 = vld [vmem:[%s169 + $0xcf0] sm:$0xff]
        %v609 = vld [vmem:[%s169 + $0xcf8] sm:$0xff]
        %v610 = vld [vmem:[%s169 + $0xd00] sm:$0xff]
        %v611 = vld [vmem:[%s169 + $0xd08] sm:$0xff]
        %v612 = vld [vmem:[%s169 + $0xd10] sm:$0xff]
        %v613 = vld [vmem:[%s169 + $0xd18] sm:$0xff]
        %v614 = vld [vmem:[%s169 + $0xd20] sm:$0xff]
        %v615 = vld [vmem:[%s169 + $0xd28] sm:$0xff]
        %v616 = vld [vmem:[%s169 + $0xd30] sm:$0xff]
        %v617 = vld [vmem:[%s169 + $0xd38] sm:$0xff]
        %v618 = vld [vmem:[%s169 + $0xd40] sm:$0xff]
        %v619 = vld [vmem:[%s169 + $0xd48] sm:$0xff]
        %v620 = vld [vmem:[%s169 + $0xd50] sm:$0xff]
        %v621 = vld [vmem:[%s169 + $0xd58] sm:$0xff]
        %v622 = vld [vmem:[%s169 + $0xd60] sm:$0xff]
        %v623 = vld [vmem:[%s169 + $0xd68] sm:$0xff]
        %v624 = vld [vmem:[%s169 + $0xd70] sm:$0xff]
        %v625 = vld [vmem:[%s169 + $0xd78] sm:$0xff]
        %s626 = sld [smem:[#allocation2]]
        %v627 = vstv %s626
        %v628 = vmul.f32 %v627, %v194
        %v629 = vmul.f32 %v627, %v195
        %v630 = vmul.f32 %v627, %v196
        %v631 = vmul.f32 %v627, %v197
        %v632 = vmul.f32 %v627, %v198
        %v633 = vmul.f32 %v627, %v199
        %v634 = vmul.f32 %v627, %v200
        %v635 = vmul.f32 %v627, %v201
        %v636 = vmul.f32 %v627, %v202
        %v637 = vmul.f32 %v627, %v203
        %v638 = vmul.f32 %v627, %v204
        %v639 = vmul.f32 %v627, %v205
        %v640 = vmul.f32 %v627, %v206
        %v641 = vmul.f32 %v627, %v207
        %v642 = vmul.f32 %v627, %v208
        %v643 = vmul.f32 %v627, %v209
        %v644 = vmul.f32 %v627, %v210
        %v645 = vmul.f32 %v627, %v211
        %v646 = vmul.f32 %v627, %v212
        %v647 = vmul.f32 %v627, %v213
        %v648 = vmul.f32 %v627, %v214
        %v649 = vmul.f32 %v627, %v215
        %v650 = vmul.f32 %v627, %v216
        %v651 = vmul.f32 %v627, %v217
        %v652 = vmul.f32 %v627, %v218
        %v653 = vmul.f32 %v627, %v219
        %v654 = vmul.f32 %v627, %v220
        %v655 = vmul.f32 %v627, %v221
        %v656 = vmul.f32 %v627, %v222
        %v657 = vmul.f32 %v627, %v223
        %v658 = vmul.f32 %v627, %v224
        %v659 = vmul.f32 %v627, %v225
        %v660 = vmul.f32 %v627, %v226
        %v661 = vmul.f32 %v627, %v227
        %v662 = vmul.f32 %v627, %v228
        %v663 = vmul.f32 %v627, %v229
        %v664 = vmul.f32 %v627, %v230
        %v665 = vmul.f32 %v627, %v231
        %v666 = vmul.f32 %v627, %v232
        %v667 = vmul.f32 %v627, %v233
        %v668 = vmul.f32 %v627, %v234
        %v669 = vmul.f32 %v627, %v235
        %v670 = vmul.f32 %v627, %v236
        %v671 = vmul.f32 %v627, %v237
        %v672 = vmul.f32 %v627, %v238
        %v673 = vmul.f32 %v627, %v239
        %v674 = vmul.f32 %v627, %v240
        %v675 = vmul.f32 %v627, %v241
        %v676 = vmul.f32 %v627, %v242
        %v677 = vmul.f32 %v627, %v243
        %v678 = vmul.f32 %v627, %v244
        %v679 = vmul.f32 %v627, %v245
        %v680 = vmul.f32 %v627, %v246
        %v681 = vmul.f32 %v627, %v247
        %v682 = vmul.f32 %v627, %v248
        %v683 = vmul.f32 %v627, %v249
        %v684 = vmul.f32 %v627, %v250
        %v685 = vmul.f32 %v627, %v251
        %v686 = vmul.f32 %v627, %v252
        %v687 = vmul.f32 %v627, %v253
        %v688 = vmul.f32 %v627, %v254
        %v689 = vmul.f32 %v627, %v255
        %v690 = vmul.f32 %v627, %v256
        %v691 = vmul.f32 %v627, %v257
        %v692 = vmul.f32 %v627, %v258
        %v693 = vmul.f32 %v627, %v259
        %v694 = vmul.f32 %v627, %v260
        %v695 = vmul.f32 %v627, %v261
        %v696 = vmul.f32 %v627, %v262
        %v697 = vmul.f32 %v627, %v263
        %v698 = vmul.f32 %v627, %v264
        %v699 = vmul.f32 %v627, %v265
        %v700 = vmul.f32 %v627, %v266
        %v701 = vmul.f32 %v627, %v267
        %v702 = vmul.f32 %v627, %v268
        %v703 = vmul.f32 %v627, %v269
        %v704 = vmul.f32 %v627, %v270
        %v705 = vmul.f32 %v627, %v271
        %v706 = vmul.f32 %v627, %v272
        %v707 = vmul.f32 %v627, %v273
        %v708 = vmul.f32 %v627, %v274
        %v709 = vmul.f32 %v627, %v275
        %v710 = vmul.f32 %v627, %v276
        %v711 = vmul.f32 %v627, %v277
        %v712 = vmul.f32 %v627, %v278
        %v713 = vmul.f32 %v627, %v279
        %v714 = vmul.f32 %v627, %v280
        %v715 = vmul.f32 %v627, %v281
        %v716 = vmul.f32 %v627, %v282
        %v717 = vmul.f32 %v627, %v283
        %v718 = vmul.f32 %v627, %v284
        %v719 = vmul.f32 %v627, %v285
        %v720 = vmul.f32 %v627, %v286
        %v721 = vmul.f32 %v627, %v287
        %v722 = vmul.f32 %v627, %v288
        %v723 = vmul.f32 %v627, %v289
        %v724 = vmul.f32 %v627, %v290
        %v725 = vmul.f32 %v627, %v291
        %v726 = vmul.f32 %v627, %v292
        %v727 = vmul.f32 %v627, %v293
        %v728 = vmul.f32 %v627, %v294
        %v729 = vmul.f32 %v627, %v295
        %v730 = vmul.f32 %v627, %v296
        %v731 = vmul.f32 %v627, %v297
        %v732 = vmul.f32 %v627, %v298
        %v733 = vmul.f32 %v627, %v299
        %v734 = vmul.f32 %v627, %v300
        %v735 = vmul.f32 %v627, %v301
        %v736 = vmul.f32 %v627, %v302
        %v737 = vmul.f32 %v627, %v303
        %v738 = vmul.f32 %v627, %v304
        %v739 = vmul.f32 %v627, %v305
        %v740 = vmul.f32 %v627, %v306
        %v741 = vmul.f32 %v627, %v307
        %v742 = vmul.f32 %v627, %v308
        %v743 = vmul.f32 %v627, %v309
        %v744 = vmul.f32 %v627, %v310
        %v745 = vmul.f32 %v627, %v311
        %v746 = vmul.f32 %v627, %v312
        %v747 = vmul.f32 %v627, %v313
        %v748 = vmul.f32 %v627, %v314
        %v749 = vmul.f32 %v627, %v315
        %v750 = vmul.f32 %v627, %v316
        %v751 = vmul.f32 %v627, %v317
        %v752 = vmul.f32 %v627, %v318
        %v753 = vmul.f32 %v627, %v319
        %v754 = vmul.f32 %v627, %v320
        %v755 = vmul.f32 %v627, %v321
        %v756 = vmul.f32 %v627, %v322
        %v757 = vmul.f32 %v627, %v323
        %v758 = vmul.f32 %v627, %v324
        %v759 = vmul.f32 %v627, %v325
        %v760 = vmul.f32 %v627, %v326
        %v761 = vmul.f32 %v627, %v327
        %v762 = vmul.f32 %v627, %v328
        %v763 = vmul.f32 %v627, %v329
        %v764 = vmul.f32 %v627, %v330
        %v765 = vmul.f32 %v627, %v331
        %v766 = vmul.f32 %v627, %v332
        %v767 = vmul.f32 %v627, %v333
        %v768 = vmul.f32 %v627, %v334
        %v769 = vmul.f32 %v627, %v335
        %v770 = vmul.f32 %v627, %v336
        %v771 = vmul.f32 %v627, %v337
        %v772 = vmul.f32 %v627, %v338
        %v773 = vmul.f32 %v627, %v339
        %v774 = vmul.f32 %v627, %v340
        %v775 = vmul.f32 %v627, %v341
        %v776 = vmul.f32 %v627, %v342
        %v777 = vmul.f32 %v627, %v343
        %v778 = vmul.f32 %v627, %v344
        %v779 = vmul.f32 %v627, %v345
        %v780 = vmul.f32 %v627, %v346
        %v781 = vmul.f32 %v627, %v347
        %v782 = vmul.f32 %v627, %v348
        %v783 = vmul.f32 %v627, %v349
        %v784 = vmul.f32 %v627, %v350
        %v785 = vmul.f32 %v627, %v351
        %v786 = vmul.f32 %v627, %v352
        %v787 = vmul.f32 %v627, %v353
        %v788 = vmul.f32 %v627, %v354
        %v789 = vmul.f32 %v627, %v355
        %v790 = vmul.f32 %v627, %v356
        %v791 = vmul.f32 %v627, %v357
        %v792 = vmul.f32 %v627, %v358
        %v793 = vmul.f32 %v627, %v359
        %v794 = vmul.f32 %v627, %v360
        %v795 = vmul.f32 %v627, %v361
        %v796 = vmul.f32 %v627, %v362
        %v797 = vmul.f32 %v627, %v363
        %v798 = vmul.f32 %v627, %v364
        %v799 = vmul.f32 %v627, %v365
        %v800 = vmul.f32 %v627, %v366
        %v801 = vmul.f32 %v627, %v367
        %v802 = vmul.f32 %v627, %v368
        %v803 = vmul.f32 %v627, %v369
        %v804 = vmul.f32 %v627, %v370
        %v805 = vmul.f32 %v627, %v371
        %v806 = vmul.f32 %v627, %v372
        %v807 = vmul.f32 %v627, %v373
        %v808 = vmul.f32 %v627, %v374
        %v809 = vmul.f32 %v627, %v375
        %v810 = vmul.f32 %v627, %v376
        %v811 = vmul.f32 %v627, %v377
        %v812 = vmul.f32 %v627, %v378
        %v813 = vmul.f32 %v627, %v379
        %v814 = vmul.f32 %v627, %v380
        %v815 = vmul.f32 %v627, %v381
        %v816 = vmul.f32 %v627, %v382
        %v817 = vmul.f32 %v627, %v383
        %v818 = vmul.f32 %v627, %v384
        %v819 = vmul.f32 %v627, %v385
        %v820 = vmul.f32 %v627, %v386
        %v821 = vmul.f32 %v627, %v387
        %v822 = vmul.f32 %v627, %v388
        %v823 = vmul.f32 %v627, %v389
        %v824 = vmul.f32 %v627, %v390
        %v825 = vmul.f32 %v627, %v391
        %v826 = vmul.f32 %v627, %v392
        %v827 = vmul.f32 %v627, %v393
        %v828 = vmul.f32 %v627, %v394
        %v829 = vmul.f32 %v627, %v395
        %v830 = vmul.f32 %v627, %v396
        %v831 = vmul.f32 %v627, %v397
        %v832 = vmul.f32 %v627, %v398
        %v833 = vmul.f32 %v627, %v399
        %v834 = vmul.f32 %v627, %v400
        %v835 = vmul.f32 %v627, %v401
        %v836 = vmul.f32 %v627, %v402
        %v837 = vmul.f32 %v627, %v403
        %v838 = vmul.f32 %v627, %v404
        %v839 = vmul.f32 %v627, %v405
        %v840 = vmul.f32 %v627, %v406
        %v841 = vmul.f32 %v627, %v407
        %v842 = vmul.f32 %v627, %v408
        %v843 = vmul.f32 %v627, %v409
        %v844 = vmul.f32 %v627, %v410
        %v845 = vmul.f32 %v627, %v411
        %v846 = vmul.f32 %v627, %v412
        %v847 = vmul.f32 %v627, %v413
        %v848 = vmul.f32 %v627, %v414
        %v849 = vmul.f32 %v627, %v415
        %v850 = vmul.f32 %v627, %v416
        %v851 = vmul.f32 %v627, %v417
        %v852 = vmul.f32 %v627, %v418
        %v853 = vmul.f32 %v627, %v419
        %v854 = vmul.f32 %v627, %v420
        %v855 = vmul.f32 %v627, %v421
        %v856 = vmul.f32 %v627, %v422
        %v857 = vmul.f32 %v627, %v423
        %v858 = vmul.f32 %v627, %v424
        %v859 = vmul.f32 %v627, %v425
        %v860 = vmul.f32 %v627, %v426
        %v861 = vmul.f32 %v627, %v427
        %v862 = vmul.f32 %v627, %v428
        %v863 = vmul.f32 %v627, %v429
        %v864 = vmul.f32 %v627, %v430
        %v865 = vmul.f32 %v627, %v431
        %v866 = vmul.f32 %v627, %v432
        %v867 = vmul.f32 %v627, %v433
        %v868 = vmul.f32 %v627, %v434
        %v869 = vmul.f32 %v627, %v435
        %v870 = vmul.f32 %v627, %v436
        %v871 = vmul.f32 %v627, %v437
        %v872 = vmul.f32 %v627, %v438
        %v873 = vmul.f32 %v627, %v439
        %v874 = vmul.f32 %v627, %v440
        %v875 = vmul.f32 %v627, %v441
        %v876 = vmul.f32 %v627, %v442
        %v877 = vmul.f32 %v627, %v443
        %v878 = vmul.f32 %v627, %v444
        %v879 = vmul.f32 %v627, %v445
        %v880 = vmul.f32 %v627, %v446
        %v881 = vmul.f32 %v627, %v447
        %v882 = vmul.f32 %v627, %v448
        %v883 = vmul.f32 %v627, %v449
        %v884 = vmul.f32 %v627, %v450
        %v885 = vmul.f32 %v627, %v451
        %v886 = vmul.f32 %v627, %v452
        %v887 = vmul.f32 %v627, %v453
        %v888 = vmul.f32 %v627, %v454
        %v889 = vmul.f32 %v627, %v455
        %v890 = vmul.f32 %v627, %v456
        %v891 = vmul.f32 %v627, %v457
        %v892 = vmul.f32 %v627, %v458
        %v893 = vmul.f32 %v627, %v459
        %v894 = vmul.f32 %v627, %v460
        %v895 = vmul.f32 %v627, %v461
        %v896 = vmul.f32 %v627, %v462
        %v897 = vmul.f32 %v627, %v463
        %v898 = vmul.f32 %v627, %v464
        %v899 = vmul.f32 %v627, %v465
        %v900 = vmul.f32 %v627, %v466
        %v901 = vmul.f32 %v627, %v467
        %v902 = vmul.f32 %v627, %v468
        %v903 = vmul.f32 %v627, %v469
        %v904 = vmul.f32 %v627, %v470
        %v905 = vmul.f32 %v627, %v471
        %v906 = vmul.f32 %v627, %v472
        %v907 = vmul.f32 %v627, %v473
        %v908 = vmul.f32 %v627, %v474
        %v909 = vmul.f32 %v627, %v475
        %v910 = vmul.f32 %v627, %v476
        %v911 = vmul.f32 %v627, %v477
        %v912 = vmul.f32 %v627, %v478
        %v913 = vmul.f32 %v627, %v479
        %v914 = vmul.f32 %v627, %v480
        %v915 = vmul.f32 %v627, %v481
        %v916 = vmul.f32 %v627, %v482
        %v917 = vmul.f32 %v627, %v483
        %v918 = vmul.f32 %v627, %v484
        %v919 = vmul.f32 %v627, %v485
        %v920 = vmul.f32 %v627, %v486
        %v921 = vmul.f32 %v627, %v487
        %v922 = vmul.f32 %v627, %v488
        %v923 = vmul.f32 %v627, %v489
        %v924 = vmul.f32 %v627, %v490
        %v925 = vmul.f32 %v627, %v491
        %v926 = vmul.f32 %v627, %v492
        %v927 = vmul.f32 %v627, %v493
        %v928 = vmul.f32 %v627, %v494
        %v929 = vmul.f32 %v627, %v495
        %v930 = vmul.f32 %v627, %v496
        %v931 = vmul.f32 %v627, %v497
        %v932 = vmul.f32 %v627, %v498
        %v933 = vmul.f32 %v627, %v499
        %v934 = vmul.f32 %v627, %v500
        %v935 = vmul.f32 %v627, %v501
        %v936 = vmul.f32 %v627, %v502
        %v937 = vmul.f32 %v627, %v503
        %v938 = vmul.f32 %v627, %v504
        %v939 = vmul.f32 %v627, %v505
        %v940 = vmul.f32 %v627, %v506
        %v941 = vmul.f32 %v627, %v507
        %v942 = vmul.f32 %v627, %v508
        %v943 = vmul.f32 %v627, %v509
        %v944 = vmul.f32 %v627, %v510
        %v945 = vmul.f32 %v627, %v511
        %v946 = vmul.f32 %v627, %v512
        %v947 = vmul.f32 %v627, %v513
        %v948 = vmul.f32 %v627, %v514
        %v949 = vmul.f32 %v627, %v515
        %v950 = vmul.f32 %v627, %v516
        %v951 = vmul.f32 %v627, %v517
        %v952 = vmul.f32 %v627, %v518
        %v953 = vmul.f32 %v627, %v519
        %v954 = vmul.f32 %v627, %v520
        %v955 = vmul.f32 %v627, %v521
        %v956 = vmul.f32 %v627, %v522
        %v957 = vmul.f32 %v627, %v523
        %v958 = vmul.f32 %v627, %v524
        %v959 = vmul.f32 %v627, %v525
        %v960 = vmul.f32 %v627, %v526
        %v961 = vmul.f32 %v627, %v527
        %v962 = vmul.f32 %v627, %v528
        %v963 = vmul.f32 %v627, %v529
        %v964 = vmul.f32 %v627, %v530
        %v965 = vmul.f32 %v627, %v531
        %v966 = vmul.f32 %v627, %v532
        %v967 = vmul.f32 %v627, %v533
        %v968 = vmul.f32 %v627, %v534
        %v969 = vmul.f32 %v627, %v535
        %v970 = vmul.f32 %v627, %v536
        %v971 = vmul.f32 %v627, %v537
        %v972 = vmul.f32 %v627, %v538
        %v973 = vmul.f32 %v627, %v539
        %v974 = vmul.f32 %v627, %v540
        %v975 = vmul.f32 %v627, %v541
        %v976 = vmul.f32 %v627, %v542
        %v977 = vmul.f32 %v627, %v543
        %v978 = vmul.f32 %v627, %v544
        %v979 = vmul.f32 %v627, %v545
        %v980 = vmul.f32 %v627, %v546
        %v981 = vmul.f32 %v627, %v547
        %v982 = vmul.f32 %v627, %v548
        %v983 = vmul.f32 %v627, %v549
        %v984 = vmul.f32 %v627, %v550
        %v985 = vmul.f32 %v627, %v551
        %v986 = vmul.f32 %v627, %v552
        %v987 = vmul.f32 %v627, %v553
        %v988 = vmul.f32 %v627, %v554
        %v989 = vmul.f32 %v627, %v555
        %v990 = vmul.f32 %v627, %v556
        %v991 = vmul.f32 %v627, %v557
        %v992 = vmul.f32 %v627, %v558
        %v993 = vmul.f32 %v627, %v559
        %v994 = vmul.f32 %v627, %v560
        %v995 = vmul.f32 %v627, %v561
        %v996 = vmul.f32 %v627, %v562
        %v997 = vmul.f32 %v627, %v563
        %v998 = vmul.f32 %v627, %v564
        %v999 = vmul.f32 %v627, %v565
        %v1000 = vmul.f32 %v627, %v566
        %v1001 = vmul.f32 %v627, %v567
        %v1002 = vmul.f32 %v627, %v568
        %v1003 = vmul.f32 %v627, %v569
        %v1004 = vmul.f32 %v627, %v570
        %v1005 = vmul.f32 %v627, %v571
        %v1006 = vmul.f32 %v627, %v572
        %v1007 = vmul.f32 %v627, %v573
        %v1008 = vmul.f32 %v627, %v574
        %v1009 = vmul.f32 %v627, %v575
        %v1010 = vmul.f32 %v627, %v576
        %v1011 = vmul.f32 %v627, %v577
        %v1012 = vmul.f32 %v627, %v578
        %v1013 = vmul.f32 %v627, %v579
        %v1014 = vmul.f32 %v627, %v580
        %v1015 = vmul.f32 %v627, %v581
        %v1016 = vmul.f32 %v627, %v582
        %v1017 = vmul.f32 %v627, %v583
        %v1018 = vmul.f32 %v627, %v584
        %v1019 = vmul.f32 %v627, %v585
        %v1020 = vmul.f32 %v627, %v586
        %v1021 = vmul.f32 %v627, %v587
        %v1022 = vmul.f32 %v627, %v588
        %v1023 = vmul.f32 %v627, %v589
        %v1024 = vmul.f32 %v627, %v590
        %v1025 = vmul.f32 %v627, %v591
        %v1026 = vmul.f32 %v627, %v592
        %v1027 = vmul.f32 %v627, %v593
        %v1028 = vmul.f32 %v627, %v594
        %v1029 = vmul.f32 %v627, %v595
        %v1030 = vmul.f32 %v627, %v596
        %v1031 = vmul.f32 %v627, %v597
        %v1032 = vmul.f32 %v627, %v598
        %v1033 = vmul.f32 %v627, %v599
        %v1034 = vmul.f32 %v627, %v600
        %v1035 = vmul.f32 %v627, %v601
        %v1036 = vmul.f32 %v627, %v602
        %v1037 = vmul.f32 %v627, %v603
        %v1038 = vmul.f32 %v627, %v604
        %v1039 = vmul.f32 %v627, %v605
        %v1040 = vmul.f32 %v627, %v606
        %v1041 = vmul.f32 %v627, %v607
        %v1042 = vmul.f32 %v627, %v608
        %v1043 = vmul.f32 %v627, %v609
        %v1044 = vmul.f32 %v627, %v610
        %v1045 = vmul.f32 %v627, %v611
        %v1046 = vmul.f32 %v627, %v612
        %v1047 = vmul.f32 %v627, %v613
        %v1048 = vmul.f32 %v627, %v614
        %v1049 = vmul.f32 %v627, %v615
        %v1050 = vmul.f32 %v627, %v616
        %v1051 = vmul.f32 %v627, %v617
        %v1052 = vmul.f32 %v627, %v618
        %v1053 = vmul.f32 %v627, %v619
        %v1054 = vmul.f32 %v627, %v620
        %v1055 = vmul.f32 %v627, %v621
        %v1056 = vmul.f32 %v627, %v622
        %v1057 = vmul.f32 %v627, %v623
        %v1058 = vmul.f32 %v627, %v624
        %v1059 = vmul.f32 %v627, %v625
        %s1060 = sld [smem:[#allocation3]]
        %v1061 = vstv %s1060
        %v1062 = vadd.f32 %v628, %v1061
        %v1063 = vadd.f32 %v629, %v1061
        %v1064 = vadd.f32 %v630, %v1061
        %v1065 = vadd.f32 %v631, %v1061
        %v1066 = vadd.f32 %v632, %v1061
        %v1067 = vadd.f32 %v633, %v1061
        %v1068 = vadd.f32 %v634, %v1061
        %v1069 = vadd.f32 %v635, %v1061
        %v1070 = vadd.f32 %v636, %v1061
        %v1071 = vadd.f32 %v637, %v1061
        %v1072 = vadd.f32 %v638, %v1061
        %v1073 = vadd.f32 %v639, %v1061
        %v1074 = vadd.f32 %v640, %v1061
        %v1075 = vadd.f32 %v641, %v1061
        %v1076 = vadd.f32 %v642, %v1061
        %v1077 = vadd.f32 %v643, %v1061
        %v1078 = vadd.f32 %v644, %v1061
        %v1079 = vadd.f32 %v645, %v1061
        %v1080 = vadd.f32 %v646, %v1061
        %v1081 = vadd.f32 %v647, %v1061
        %v1082 = vadd.f32 %v648, %v1061
        %v1083 = vadd.f32 %v649, %v1061
        %v1084 = vadd.f32 %v650, %v1061
        %v1085 = vadd.f32 %v651, %v1061
        %v1086 = vadd.f32 %v652, %v1061
        %v1087 = vadd.f32 %v653, %v1061
        %v1088 = vadd.f32 %v654, %v1061
        %v1089 = vadd.f32 %v655, %v1061
        %v1090 = vadd.f32 %v656, %v1061
        %v1091 = vadd.f32 %v657, %v1061
        %v1092 = vadd.f32 %v658, %v1061
        %v1093 = vadd.f32 %v659, %v1061
        %v1094 = vadd.f32 %v660, %v1061
        %v1095 = vadd.f32 %v661, %v1061
        %v1096 = vadd.f32 %v662, %v1061
        %v1097 = vadd.f32 %v663, %v1061
        %v1098 = vadd.f32 %v664, %v1061
        %v1099 = vadd.f32 %v665, %v1061
        %v1100 = vadd.f32 %v666, %v1061
        %v1101 = vadd.f32 %v667, %v1061
        %v1102 = vadd.f32 %v668, %v1061
        %v1103 = vadd.f32 %v669, %v1061
        %v1104 = vadd.f32 %v670, %v1061
        %v1105 = vadd.f32 %v671, %v1061
        %v1106 = vadd.f32 %v672, %v1061
        %v1107 = vadd.f32 %v673, %v1061
        %v1108 = vadd.f32 %v674, %v1061
        %v1109 = vadd.f32 %v675, %v1061
        %v1110 = vadd.f32 %v676, %v1061
        %v1111 = vadd.f32 %v677, %v1061
        %v1112 = vadd.f32 %v678, %v1061
        %v1113 = vadd.f32 %v679, %v1061
        %v1114 = vadd.f32 %v680, %v1061
        %v1115 = vadd.f32 %v681, %v1061
        %v1116 = vadd.f32 %v682, %v1061
        %v1117 = vadd.f32 %v683, %v1061
        %v1118 = vadd.f32 %v684, %v1061
        %v1119 = vadd.f32 %v685, %v1061
        %v1120 = vadd.f32 %v686, %v1061
        %v1121 = vadd.f32 %v687, %v1061
        %v1122 = vadd.f32 %v688, %v1061
        %v1123 = vadd.f32 %v689, %v1061
        %v1124 = vadd.f32 %v690, %v1061
        %v1125 = vadd.f32 %v691, %v1061
        %v1126 = vadd.f32 %v692, %v1061
        %v1127 = vadd.f32 %v693, %v1061
        %v1128 = vadd.f32 %v694, %v1061
        %v1129 = vadd.f32 %v695, %v1061
        %v1130 = vadd.f32 %v696, %v1061
        %v1131 = vadd.f32 %v697, %v1061
        %v1132 = vadd.f32 %v698, %v1061
        %v1133 = vadd.f32 %v699, %v1061
        %v1134 = vadd.f32 %v700, %v1061
        %v1135 = vadd.f32 %v701, %v1061
        %v1136 = vadd.f32 %v702, %v1061
        %v1137 = vadd.f32 %v703, %v1061
        %v1138 = vadd.f32 %v704, %v1061
        %v1139 = vadd.f32 %v705, %v1061
        %v1140 = vadd.f32 %v706, %v1061
        %v1141 = vadd.f32 %v707, %v1061
        %v1142 = vadd.f32 %v708, %v1061
        %v1143 = vadd.f32 %v709, %v1061
        %v1144 = vadd.f32 %v710, %v1061
        %v1145 = vadd.f32 %v711, %v1061
        %v1146 = vadd.f32 %v712, %v1061
        %v1147 = vadd.f32 %v713, %v1061
        %v1148 = vadd.f32 %v714, %v1061
        %v1149 = vadd.f32 %v715, %v1061
        %v1150 = vadd.f32 %v716, %v1061
        %v1151 = vadd.f32 %v717, %v1061
        %v1152 = vadd.f32 %v718, %v1061
        %v1153 = vadd.f32 %v719, %v1061
        %v1154 = vadd.f32 %v720, %v1061
        %v1155 = vadd.f32 %v721, %v1061
        %v1156 = vadd.f32 %v722, %v1061
        %v1157 = vadd.f32 %v723, %v1061
        %v1158 = vadd.f32 %v724, %v1061
        %v1159 = vadd.f32 %v725, %v1061
        %v1160 = vadd.f32 %v726, %v1061
        %v1161 = vadd.f32 %v727, %v1061
        %v1162 = vadd.f32 %v728, %v1061
        %v1163 = vadd.f32 %v729, %v1061
        %v1164 = vadd.f32 %v730, %v1061
        %v1165 = vadd.f32 %v731, %v1061
        %v1166 = vadd.f32 %v732, %v1061
        %v1167 = vadd.f32 %v733, %v1061
        %v1168 = vadd.f32 %v734, %v1061
        %v1169 = vadd.f32 %v735, %v1061
        %v1170 = vadd.f32 %v736, %v1061
        %v1171 = vadd.f32 %v737, %v1061
        %v1172 = vadd.f32 %v738, %v1061
        %v1173 = vadd.f32 %v739, %v1061
        %v1174 = vadd.f32 %v740, %v1061
        %v1175 = vadd.f32 %v741, %v1061
        %v1176 = vadd.f32 %v742, %v1061
        %v1177 = vadd.f32 %v743, %v1061
        %v1178 = vadd.f32 %v744, %v1061
        %v1179 = vadd.f32 %v745, %v1061
        %v1180 = vadd.f32 %v746, %v1061
        %v1181 = vadd.f32 %v747, %v1061
        %v1182 = vadd.f32 %v748, %v1061
        %v1183 = vadd.f32 %v749, %v1061
        %v1184 = vadd.f32 %v750, %v1061
        %v1185 = vadd.f32 %v751, %v1061
        %v1186 = vadd.f32 %v752, %v1061
        %v1187 = vadd.f32 %v753, %v1061
        %v1188 = vadd.f32 %v754, %v1061
        %v1189 = vadd.f32 %v755, %v1061
        %v1190 = vadd.f32 %v756, %v1061
        %v1191 = vadd.f32 %v757, %v1061
        %v1192 = vadd.f32 %v758, %v1061
        %v1193 = vadd.f32 %v759, %v1061
        %v1194 = vadd.f32 %v760, %v1061
        %v1195 = vadd.f32 %v761, %v1061
        %v1196 = vadd.f32 %v762, %v1061
        %v1197 = vadd.f32 %v763, %v1061
        %v1198 = vadd.f32 %v764, %v1061
        %v1199 = vadd.f32 %v765, %v1061
        %v1200 = vadd.f32 %v766, %v1061
        %v1201 = vadd.f32 %v767, %v1061
        %v1202 = vadd.f32 %v768, %v1061
        %v1203 = vadd.f32 %v769, %v1061
        %v1204 = vadd.f32 %v770, %v1061
        %v1205 = vadd.f32 %v771, %v1061
        %v1206 = vadd.f32 %v772, %v1061
        %v1207 = vadd.f32 %v773, %v1061
        %v1208 = vadd.f32 %v774, %v1061
        %v1209 = vadd.f32 %v775, %v1061
        %v1210 = vadd.f32 %v776, %v1061
        %v1211 = vadd.f32 %v777, %v1061
        %v1212 = vadd.f32 %v778, %v1061
        %v1213 = vadd.f32 %v779, %v1061
        %v1214 = vadd.f32 %v780, %v1061
        %v1215 = vadd.f32 %v781, %v1061
        %v1216 = vadd.f32 %v782, %v1061
        %v1217 = vadd.f32 %v783, %v1061
        %v1218 = vadd.f32 %v784, %v1061
        %v1219 = vadd.f32 %v785, %v1061
        %v1220 = vadd.f32 %v786, %v1061
        %v1221 = vadd.f32 %v787, %v1061
        %v1222 = vadd.f32 %v788, %v1061
        %v1223 = vadd.f32 %v789, %v1061
        %v1224 = vadd.f32 %v790, %v1061
        %v1225 = vadd.f32 %v791, %v1061
        %v1226 = vadd.f32 %v792, %v1061
        %v1227 = vadd.f32 %v793, %v1061
        %v1228 = vadd.f32 %v794, %v1061
        %v1229 = vadd.f32 %v795, %v1061
        %v1230 = vadd.f32 %v796, %v1061
        %v1231 = vadd.f32 %v797, %v1061
        %v1232 = vadd.f32 %v798, %v1061
        %v1233 = vadd.f32 %v799, %v1061
        %v1234 = vadd.f32 %v800, %v1061
        %v1235 = vadd.f32 %v801, %v1061
        %v1236 = vadd.f32 %v802, %v1061
        %v1237 = vadd.f32 %v803, %v1061
        %v1238 = vadd.f32 %v804, %v1061
        %v1239 = vadd.f32 %v805, %v1061
        %v1240 = vadd.f32 %v806, %v1061
        %v1241 = vadd.f32 %v807, %v1061
        %v1242 = vadd.f32 %v808, %v1061
        %v1243 = vadd.f32 %v809, %v1061
        %v1244 = vadd.f32 %v810, %v1061
        %v1245 = vadd.f32 %v811, %v1061
        %v1246 = vadd.f32 %v812, %v1061
        %v1247 = vadd.f32 %v813, %v1061
        %v1248 = vadd.f32 %v814, %v1061
        %v1249 = vadd.f32 %v815, %v1061
        %v1250 = vadd.f32 %v816, %v1061
        %v1251 = vadd.f32 %v817, %v1061
        %v1252 = vadd.f32 %v818, %v1061
        %v1253 = vadd.f32 %v819, %v1061
        %v1254 = vadd.f32 %v820, %v1061
        %v1255 = vadd.f32 %v821, %v1061
        %v1256 = vadd.f32 %v822, %v1061
        %v1257 = vadd.f32 %v823, %v1061
        %v1258 = vadd.f32 %v824, %v1061
        %v1259 = vadd.f32 %v825, %v1061
        %v1260 = vadd.f32 %v826, %v1061
        %v1261 = vadd.f32 %v827, %v1061
        %v1262 = vadd.f32 %v828, %v1061
        %v1263 = vadd.f32 %v829, %v1061
        %v1264 = vadd.f32 %v830, %v1061
        %v1265 = vadd.f32 %v831, %v1061
        %v1266 = vadd.f32 %v832, %v1061
        %v1267 = vadd.f32 %v833, %v1061
        %v1268 = vadd.f32 %v834, %v1061
        %v1269 = vadd.f32 %v835, %v1061
        %v1270 = vadd.f32 %v836, %v1061
        %v1271 = vadd.f32 %v837, %v1061
        %v1272 = vadd.f32 %v838, %v1061
        %v1273 = vadd.f32 %v839, %v1061
        %v1274 = vadd.f32 %v840, %v1061
        %v1275 = vadd.f32 %v841, %v1061
        %v1276 = vadd.f32 %v842, %v1061
        %v1277 = vadd.f32 %v843, %v1061
        %v1278 = vadd.f32 %v844, %v1061
        %v1279 = vadd.f32 %v845, %v1061
        %v1280 = vadd.f32 %v846, %v1061
        %v1281 = vadd.f32 %v847, %v1061
        %v1282 = vadd.f32 %v848, %v1061
        %v1283 = vadd.f32 %v849, %v1061
        %v1284 = vadd.f32 %v850, %v1061
        %v1285 = vadd.f32 %v851, %v1061
        %v1286 = vadd.f32 %v852, %v1061
        %v1287 = vadd.f32 %v853, %v1061
        %v1288 = vadd.f32 %v854, %v1061
        %v1289 = vadd.f32 %v855, %v1061
        %v1290 = vadd.f32 %v856, %v1061
        %v1291 = vadd.f32 %v857, %v1061
        %v1292 = vadd.f32 %v858, %v1061
        %v1293 = vadd.f32 %v859, %v1061
        %v1294 = vadd.f32 %v860, %v1061
        %v1295 = vadd.f32 %v861, %v1061
        %v1296 = vadd.f32 %v862, %v1061
        %v1297 = vadd.f32 %v863, %v1061
        %v1298 = vadd.f32 %v864, %v1061
        %v1299 = vadd.f32 %v865, %v1061
        %v1300 = vadd.f32 %v866, %v1061
        %v1301 = vadd.f32 %v867, %v1061
        %v1302 = vadd.f32 %v868, %v1061
        %v1303 = vadd.f32 %v869, %v1061
        %v1304 = vadd.f32 %v870, %v1061
        %v1305 = vadd.f32 %v871, %v1061
        %v1306 = vadd.f32 %v872, %v1061
        %v1307 = vadd.f32 %v873, %v1061
        %v1308 = vadd.f32 %v874, %v1061
        %v1309 = vadd.f32 %v875, %v1061
        %v1310 = vadd.f32 %v876, %v1061
        %v1311 = vadd.f32 %v877, %v1061
        %v1312 = vadd.f32 %v878, %v1061
        %v1313 = vadd.f32 %v879, %v1061
        %v1314 = vadd.f32 %v880, %v1061
        %v1315 = vadd.f32 %v881, %v1061
        %v1316 = vadd.f32 %v882, %v1061
        %v1317 = vadd.f32 %v883, %v1061
        %v1318 = vadd.f32 %v884, %v1061
        %v1319 = vadd.f32 %v885, %v1061
        %v1320 = vadd.f32 %v886, %v1061
        %v1321 = vadd.f32 %v887, %v1061
        %v1322 = vadd.f32 %v888, %v1061
        %v1323 = vadd.f32 %v889, %v1061
        %v1324 = vadd.f32 %v890, %v1061
        %v1325 = vadd.f32 %v891, %v1061
        %v1326 = vadd.f32 %v892, %v1061
        %v1327 = vadd.f32 %v893, %v1061
        %v1328 = vadd.f32 %v894, %v1061
        %v1329 = vadd.f32 %v895, %v1061
        %v1330 = vadd.f32 %v896, %v1061
        %v1331 = vadd.f32 %v897, %v1061
        %v1332 = vadd.f32 %v898, %v1061
        %v1333 = vadd.f32 %v899, %v1061
        %v1334 = vadd.f32 %v900, %v1061
        %v1335 = vadd.f32 %v901, %v1061
        %v1336 = vadd.f32 %v902, %v1061
        %v1337 = vadd.f32 %v903, %v1061
        %v1338 = vadd.f32 %v904, %v1061
        %v1339 = vadd.f32 %v905, %v1061
        %v1340 = vadd.f32 %v906, %v1061
        %v1341 = vadd.f32 %v907, %v1061
        %v1342 = vadd.f32 %v908, %v1061
        %v1343 = vadd.f32 %v909, %v1061
        %v1344 = vadd.f32 %v910, %v1061
        %v1345 = vadd.f32 %v911, %v1061
        %v1346 = vadd.f32 %v912, %v1061
        %v1347 = vadd.f32 %v913, %v1061
        %v1348 = vadd.f32 %v914, %v1061
        %v1349 = vadd.f32 %v915, %v1061
        %v1350 = vadd.f32 %v916, %v1061
        %v1351 = vadd.f32 %v917, %v1061
        %v1352 = vadd.f32 %v918, %v1061
        %v1353 = vadd.f32 %v919, %v1061
        %v1354 = vadd.f32 %v920, %v1061
        %v1355 = vadd.f32 %v921, %v1061
        %v1356 = vadd.f32 %v922, %v1061
        %v1357 = vadd.f32 %v923, %v1061
        %v1358 = vadd.f32 %v924, %v1061
        %v1359 = vadd.f32 %v925, %v1061
        %v1360 = vadd.f32 %v926, %v1061
        %v1361 = vadd.f32 %v927, %v1061
        %v1362 = vadd.f32 %v928, %v1061
        %v1363 = vadd.f32 %v929, %v1061
        %v1364 = vadd.f32 %v930, %v1061
        %v1365 = vadd.f32 %v931, %v1061
        %v1366 = vadd.f32 %v932, %v1061
        %v1367 = vadd.f32 %v933, %v1061
        %v1368 = vadd.f32 %v934, %v1061
        %v1369 = vadd.f32 %v935, %v1061
        %v1370 = vadd.f32 %v936, %v1061
        %v1371 = vadd.f32 %v937, %v1061
        %v1372 = vadd.f32 %v938, %v1061
        %v1373 = vadd.f32 %v939, %v1061
        %v1374 = vadd.f32 %v940, %v1061
        %v1375 = vadd.f32 %v941, %v1061
        %v1376 = vadd.f32 %v942, %v1061
        %v1377 = vadd.f32 %v943, %v1061
        %v1378 = vadd.f32 %v944, %v1061
        %v1379 = vadd.f32 %v945, %v1061
        %v1380 = vadd.f32 %v946, %v1061
        %v1381 = vadd.f32 %v947, %v1061
        %v1382 = vadd.f32 %v948, %v1061
        %v1383 = vadd.f32 %v949, %v1061
        %v1384 = vadd.f32 %v950, %v1061
        %v1385 = vadd.f32 %v951, %v1061
        %v1386 = vadd.f32 %v952, %v1061
        %v1387 = vadd.f32 %v953, %v1061
        %v1388 = vadd.f32 %v954, %v1061
        %v1389 = vadd.f32 %v955, %v1061
        %v1390 = vadd.f32 %v956, %v1061
        %v1391 = vadd.f32 %v957, %v1061
        %v1392 = vadd.f32 %v958, %v1061
        %v1393 = vadd.f32 %v959, %v1061
        %v1394 = vadd.f32 %v960, %v1061
        %v1395 = vadd.f32 %v961, %v1061
        %v1396 = vadd.f32 %v962, %v1061
        %v1397 = vadd.f32 %v963, %v1061
        %v1398 = vadd.f32 %v964, %v1061
        %v1399 = vadd.f32 %v965, %v1061
        %v1400 = vadd.f32 %v966, %v1061
        %v1401 = vadd.f32 %v967, %v1061
        %v1402 = vadd.f32 %v968, %v1061
        %v1403 = vadd.f32 %v969, %v1061
        %v1404 = vadd.f32 %v970, %v1061
        %v1405 = vadd.f32 %v971, %v1061
        %v1406 = vadd.f32 %v972, %v1061
        %v1407 = vadd.f32 %v973, %v1061
        %v1408 = vadd.f32 %v974, %v1061
        %v1409 = vadd.f32 %v975, %v1061
        %v1410 = vadd.f32 %v976, %v1061
        %v1411 = vadd.f32 %v977, %v1061
        %v1412 = vadd.f32 %v978, %v1061
        %v1413 = vadd.f32 %v979, %v1061
        %v1414 = vadd.f32 %v980, %v1061
        %v1415 = vadd.f32 %v981, %v1061
        %v1416 = vadd.f32 %v982, %v1061
        %v1417 = vadd.f32 %v983, %v1061
        %v1418 = vadd.f32 %v984, %v1061
        %v1419 = vadd.f32 %v985, %v1061
        %v1420 = vadd.f32 %v986, %v1061
        %v1421 = vadd.f32 %v987, %v1061
        %v1422 = vadd.f32 %v988, %v1061
        %v1423 = vadd.f32 %v989, %v1061
        %v1424 = vadd.f32 %v990, %v1061
        %v1425 = vadd.f32 %v991, %v1061
        %v1426 = vadd.f32 %v992, %v1061
        %v1427 = vadd.f32 %v993, %v1061
        %v1428 = vadd.f32 %v994, %v1061
        %v1429 = vadd.f32 %v995, %v1061
        %v1430 = vadd.f32 %v996, %v1061
        %v1431 = vadd.f32 %v997, %v1061
        %v1432 = vadd.f32 %v998, %v1061
        %v1433 = vadd.f32 %v999, %v1061
        %v1434 = vadd.f32 %v1000, %v1061
        %v1435 = vadd.f32 %v1001, %v1061
        %v1436 = vadd.f32 %v1002, %v1061
        %v1437 = vadd.f32 %v1003, %v1061
        %v1438 = vadd.f32 %v1004, %v1061
        %v1439 = vadd.f32 %v1005, %v1061
        %v1440 = vadd.f32 %v1006, %v1061
        %v1441 = vadd.f32 %v1007, %v1061
        %v1442 = vadd.f32 %v1008, %v1061
        %v1443 = vadd.f32 %v1009, %v1061
        %v1444 = vadd.f32 %v1010, %v1061
        %v1445 = vadd.f32 %v1011, %v1061
        %v1446 = vadd.f32 %v1012, %v1061
        %v1447 = vadd.f32 %v1013, %v1061
        %v1448 = vadd.f32 %v1014, %v1061
        %v1449 = vadd.f32 %v1015, %v1061
        %v1450 = vadd.f32 %v1016, %v1061
        %v1451 = vadd.f32 %v1017, %v1061
        %v1452 = vadd.f32 %v1018, %v1061
        %v1453 = vadd.f32 %v1019, %v1061
        %v1454 = vadd.f32 %v1020, %v1061
        %v1455 = vadd.f32 %v1021, %v1061
        %v1456 = vadd.f32 %v1022, %v1061
        %v1457 = vadd.f32 %v1023, %v1061
        %v1458 = vadd.f32 %v1024, %v1061
        %v1459 = vadd.f32 %v1025, %v1061
        %v1460 = vadd.f32 %v1026, %v1061
        %v1461 = vadd.f32 %v1027, %v1061
        %v1462 = vadd.f32 %v1028, %v1061
        %v1463 = vadd.f32 %v1029, %v1061
        %v1464 = vadd.f32 %v1030, %v1061
        %v1465 = vadd.f32 %v1031, %v1061
        %v1466 = vadd.f32 %v1032, %v1061
        %v1467 = vadd.f32 %v1033, %v1061
        %v1468 = vadd.f32 %v1034, %v1061
        %v1469 = vadd.f32 %v1035, %v1061
        %v1470 = vadd.f32 %v1036, %v1061
        %v1471 = vadd.f32 %v1037, %v1061
        %v1472 = vadd.f32 %v1038, %v1061
        %v1473 = vadd.f32 %v1039, %v1061
        %v1474 = vadd.f32 %v1040, %v1061
        %v1475 = vadd.f32 %v1041, %v1061
        %v1476 = vadd.f32 %v1042, %v1061
        %v1477 = vadd.f32 %v1043, %v1061
        %v1478 = vadd.f32 %v1044, %v1061
        %v1479 = vadd.f32 %v1045, %v1061
        %v1480 = vadd.f32 %v1046, %v1061
        %v1481 = vadd.f32 %v1047, %v1061
        %v1482 = vadd.f32 %v1048, %v1061
        %v1483 = vadd.f32 %v1049, %v1061
        %v1484 = vadd.f32 %v1050, %v1061
        %v1485 = vadd.f32 %v1051, %v1061
        %v1486 = vadd.f32 %v1052, %v1061
        %v1487 = vadd.f32 %v1053, %v1061
        %v1488 = vadd.f32 %v1054, %v1061
        %v1489 = vadd.f32 %v1055, %v1061
        %v1490 = vadd.f32 %v1056, %v1061
        %v1491 = vadd.f32 %v1057, %v1061
        %v1492 = vadd.f32 %v1058, %v1061
        %v1493 = vadd.f32 %v1059, %v1061
        %1494 = vst [vmem:[%s191] sm:$0xff] %v1062
        %1495 = vst [vmem:[%s191 + $0x8] sm:$0xff] %v1063
        %1496 = vst [vmem:[%s191 + $0x10] sm:$0xff] %v1064
        %1497 = vst [vmem:[%s191 + $0x18] sm:$0xff] %v1065
        %1498 = vst [vmem:[%s191 + $0x20] sm:$0xff] %v1066
        %1499 = vst [vmem:[%s191 + $0x28] sm:$0xff] %v1067
        %1500 = vst [vmem:[%s191 + $0x30] sm:$0xff] %v1068
        %1501 = vst [vmem:[%s191 + $0x38] sm:$0xff] %v1069
        %1502 = vst [vmem:[%s191 + $0x40] sm:$0xff] %v1070
        %1503 = vst [vmem:[%s191 + $0x48] sm:$0xff] %v1071
        %1504 = vst [vmem:[%s191 + $0x50] sm:$0xff] %v1072
        %1505 = vst [vmem:[%s191 + $0x58] sm:$0xff] %v1073
        %1506 = vst [vmem:[%s191 + $0x60] sm:$0xff] %v1074
        %1507 = vst [vmem:[%s191 + $0x68] sm:$0xff] %v1075
        %1508 = vst [vmem:[%s191 + $0x70] sm:$0xff] %v1076
        %1509 = vst [vmem:[%s191 + $0x78] sm:$0xff] %v1077
        %1510 = vst [vmem:[%s191 + $0x80] sm:$0xff] %v1078
        %1511 = vst [vmem:[%s191 + $0x88] sm:$0xff] %v1079
        %1512 = vst [vmem:[%s191 + $0x90] sm:$0xff] %v1080
        %1513 = vst [vmem:[%s191 + $0x98] sm:$0xff] %v1081
        %1514 = vst [vmem:[%s191 + $0xa0] sm:$0xff] %v1082
        %1515 = vst [vmem:[%s191 + $0xa8] sm:$0xff] %v1083
        %1516 = vst [vmem:[%s191 + $0xb0] sm:$0xff] %v1084
        %1517 = vst [vmem:[%s191 + $0xb8] sm:$0xff] %v1085
        %1518 = vst [vmem:[%s191 + $0xc0] sm:$0xff] %v1086
        %1519 = vst [vmem:[%s191 + $0xc8] sm:$0xff] %v1087
        %1520 = vst [vmem:[%s191 + $0xd0] sm:$0xff] %v1088
        %1521 = vst [vmem:[%s191 + $0xd8] sm:$0xff] %v1089
        %1522 = vst [vmem:[%s191 + $0xe0] sm:$0xff] %v1090
        %1523 = vst [vmem:[%s191 + $0xe8] sm:$0xff] %v1091
        %1524 = vst [vmem:[%s191 + $0xf0] sm:$0xff] %v1092
        %1525 = vst [vmem:[%s191 + $0xf8] sm:$0xff] %v1093
        %1526 = vst [vmem:[%s191 + $0x100] sm:$0xff] %v1094
        %1527 = vst [vmem:[%s191 + $0x108] sm:$0xff] %v1095
        %1528 = vst [vmem:[%s191 + $0x110] sm:$0xff] %v1096
        %1529 = vst [vmem:[%s191 + $0x118] sm:$0xff] %v1097
        %1530 = vst [vmem:[%s191 + $0x120] sm:$0xff] %v1098
        %1531 = vst [vmem:[%s191 + $0x128] sm:$0xff] %v1099
        %1532 = vst [vmem:[%s191 + $0x130] sm:$0xff] %v1100
        %1533 = vst [vmem:[%s191 + $0x138] sm:$0xff] %v1101
        %1534 = vst [vmem:[%s191 + $0x140] sm:$0xff] %v1102
        %1535 = vst [vmem:[%s191 + $0x148] sm:$0xff] %v1103
        %1536 = vst [vmem:[%s191 + $0x150] sm:$0xff] %v1104
        %1537 = vst [vmem:[%s191 + $0x158] sm:$0xff] %v1105
        %1538 = vst [vmem:[%s191 + $0x160] sm:$0xff] %v1106
        %1539 = vst [vmem:[%s191 + $0x168] sm:$0xff] %v1107
        %1540 = vst [vmem:[%s191 + $0x170] sm:$0xff] %v1108
        %1541 = vst [vmem:[%s191 + $0x178] sm:$0xff] %v1109
        %1542 = vst [vmem:[%s191 + $0x180] sm:$0xff] %v1110
        %1543 = vst [vmem:[%s191 + $0x188] sm:$0xff] %v1111
        %1544 = vst [vmem:[%s191 + $0x190] sm:$0xff] %v1112
        %1545 = vst [vmem:[%s191 + $0x198] sm:$0xff] %v1113
        %1546 = vst [vmem:[%s191 + $0x1a0] sm:$0xff] %v1114
        %1547 = vst [vmem:[%s191 + $0x1a8] sm:$0xff] %v1115
        %1548 = vst [vmem:[%s191 + $0x1b0] sm:$0xff] %v1116
        %1549 = vst [vmem:[%s191 + $0x1b8] sm:$0xff] %v1117
        %1550 = vst [vmem:[%s191 + $0x1c0] sm:$0xff] %v1118
        %1551 = vst [vmem:[%s191 + $0x1c8] sm:$0xff] %v1119
        %1552 = vst [vmem:[%s191 + $0x1d0] sm:$0xff] %v1120
        %1553 = vst [vmem:[%s191 + $0x1d8] sm:$0xff] %v1121
        %1554 = vst [vmem:[%s191 + $0x1e0] sm:$0xff] %v1122
        %1555 = vst [vmem:[%s191 + $0x1e8] sm:$0xff] %v1123
        %1556 = vst [vmem:[%s191 + $0x1f0] sm:$0xff] %v1124
        %1557 = vst [vmem:[%s191 + $0x1f8] sm:$0xff] %v1125
        %1558 = vst [vmem:[%s191 + $0x200] sm:$0xff] %v1126
        %1559 = vst [vmem:[%s191 + $0x208] sm:$0xff] %v1127
        %1560 = vst [vmem:[%s191 + $0x210] sm:$0xff] %v1128
        %1561 = vst [vmem:[%s191 + $0x218] sm:$0xff] %v1129
        %1562 = vst [vmem:[%s191 + $0x220] sm:$0xff] %v1130
        %1563 = vst [vmem:[%s191 + $0x228] sm:$0xff] %v1131
        %1564 = vst [vmem:[%s191 + $0x230] sm:$0xff] %v1132
        %1565 = vst [vmem:[%s191 + $0x238] sm:$0xff] %v1133
        %1566 = vst [vmem:[%s191 + $0x240] sm:$0xff] %v1134
        %1567 = vst [vmem:[%s191 + $0x248] sm:$0xff] %v1135
        %1568 = vst [vmem:[%s191 + $0x250] sm:$0xff] %v1136
        %1569 = vst [vmem:[%s191 + $0x258] sm:$0xff] %v1137
        %1570 = vst [vmem:[%s191 + $0x260] sm:$0xff] %v1138
        %1571 = vst [vmem:[%s191 + $0x268] sm:$0xff] %v1139
        %1572 = vst [vmem:[%s191 + $0x270] sm:$0xff] %v1140
        %1573 = vst [vmem:[%s191 + $0x278] sm:$0xff] %v1141
        %1574 = vst [vmem:[%s191 + $0x280] sm:$0xff] %v1142
        %1575 = vst [vmem:[%s191 + $0x288] sm:$0xff] %v1143
        %1576 = vst [vmem:[%s191 + $0x290] sm:$0xff] %v1144
        %1577 = vst [vmem:[%s191 + $0x298] sm:$0xff] %v1145
        %1578 = vst [vmem:[%s191 + $0x2a0] sm:$0xff] %v1146
        %1579 = vst [vmem:[%s191 + $0x2a8] sm:$0xff] %v1147
        %1580 = vst [vmem:[%s191 + $0x2b0] sm:$0xff] %v1148
        %1581 = vst [vmem:[%s191 + $0x2b8] sm:$0xff] %v1149
        %1582 = vst [vmem:[%s191 + $0x2c0] sm:$0xff] %v1150
        %1583 = vst [vmem:[%s191 + $0x2c8] sm:$0xff] %v1151
        %1584 = vst [vmem:[%s191 + $0x2d0] sm:$0xff] %v1152
        %1585 = vst [vmem:[%s191 + $0x2d8] sm:$0xff] %v1153
        %1586 = vst [vmem:[%s191 + $0x2e0] sm:$0xff] %v1154
        %1587 = vst [vmem:[%s191 + $0x2e8] sm:$0xff] %v1155
        %1588 = vst [vmem:[%s191 + $0x2f0] sm:$0xff] %v1156
        %1589 = vst [vmem:[%s191 + $0x2f8] sm:$0xff] %v1157
        %1590 = vst [vmem:[%s191 + $0x300] sm:$0xff] %v1158
        %1591 = vst [vmem:[%s191 + $0x308] sm:$0xff] %v1159
        %1592 = vst [vmem:[%s191 + $0x310] sm:$0xff] %v1160
        %1593 = vst [vmem:[%s191 + $0x318] sm:$0xff] %v1161
        %1594 = vst [vmem:[%s191 + $0x320] sm:$0xff] %v1162
        %1595 = vst [vmem:[%s191 + $0x328] sm:$0xff] %v1163
        %1596 = vst [vmem:[%s191 + $0x330] sm:$0xff] %v1164
        %1597 = vst [vmem:[%s191 + $0x338] sm:$0xff] %v1165
        %1598 = vst [vmem:[%s191 + $0x340] sm:$0xff] %v1166
        %1599 = vst [vmem:[%s191 + $0x348] sm:$0xff] %v1167
        %1600 = vst [vmem:[%s191 + $0x350] sm:$0xff] %v1168
        %1601 = vst [vmem:[%s191 + $0x358] sm:$0xff] %v1169
        %1602 = vst [vmem:[%s191 + $0x360] sm:$0xff] %v1170
        %1603 = vst [vmem:[%s191 + $0x368] sm:$0xff] %v1171
        %1604 = vst [vmem:[%s191 + $0x370] sm:$0xff] %v1172
        %1605 = vst [vmem:[%s191 + $0x378] sm:$0xff] %v1173
        %1606 = vst [vmem:[%s191 + $0x380] sm:$0xff] %v1174
        %1607 = vst [vmem:[%s191 + $0x388] sm:$0xff] %v1175
        %1608 = vst [vmem:[%s191 + $0x390] sm:$0xff] %v1176
        %1609 = vst [vmem:[%s191 + $0x398] sm:$0xff] %v1177
        %1610 = vst [vmem:[%s191 + $0x3a0] sm:$0xff] %v1178
        %1611 = vst [vmem:[%s191 + $0x3a8] sm:$0xff] %v1179
        %1612 = vst [vmem:[%s191 + $0x3b0] sm:$0xff] %v1180
        %1613 = vst [vmem:[%s191 + $0x3b8] sm:$0xff] %v1181
        %1614 = vst [vmem:[%s191 + $0x3c0] sm:$0xff] %v1182
        %1615 = vst [vmem:[%s191 + $0x3c8] sm:$0xff] %v1183
        %1616 = vst [vmem:[%s191 + $0x3d0] sm:$0xff] %v1184
        %1617 = vst [vmem:[%s191 + $0x3d8] sm:$0xff] %v1185
        %1618 = vst [vmem:[%s191 + $0x3e0] sm:$0xff] %v1186
        %1619 = vst [vmem:[%s191 + $0x3e8] sm:$0xff] %v1187
        %1620 = vst [vmem:[%s191 + $0x3f0] sm:$0xff] %v1188
        %1621 = vst [vmem:[%s191 + $0x3f8] sm:$0xff] %v1189
        %1622 = vst [vmem:[%s191 + $0x400] sm:$0xff] %v1190
        %1623 = vst [vmem:[%s191 + $0x408] sm:$0xff] %v1191
        %1624 = vst [vmem:[%s191 + $0x410] sm:$0xff] %v1192
        %1625 = vst [vmem:[%s191 + $0x418] sm:$0xff] %v1193
        %1626 = vst [vmem:[%s191 + $0x420] sm:$0xff] %v1194
        %1627 = vst [vmem:[%s191 + $0x428] sm:$0xff] %v1195
        %1628 = vst [vmem:[%s191 + $0x430] sm:$0xff] %v1196
        %1629 = vst [vmem:[%s191 + $0x438] sm:$0xff] %v1197
        %1630 = vst [vmem:[%s191 + $0x440] sm:$0xff] %v1198
        %1631 = vst [vmem:[%s191 + $0x448] sm:$0xff] %v1199
        %1632 = vst [vmem:[%s191 + $0x450] sm:$0xff] %v1200
        %1633 = vst [vmem:[%s191 + $0x458] sm:$0xff] %v1201
        %1634 = vst [vmem:[%s191 + $0x460] sm:$0xff] %v1202
        %1635 = vst [vmem:[%s191 + $0x468] sm:$0xff] %v1203
        %1636 = vst [vmem:[%s191 + $0x470] sm:$0xff] %v1204
        %1637 = vst [vmem:[%s191 + $0x478] sm:$0xff] %v1205
        %1638 = vst [vmem:[%s191 + $0x480] sm:$0xff] %v1206
        %1639 = vst [vmem:[%s191 + $0x488] sm:$0xff] %v1207
        %1640 = vst [vmem:[%s191 + $0x490] sm:$0xff] %v1208
        %1641 = vst [vmem:[%s191 + $0x498] sm:$0xff] %v1209
        %1642 = vst [vmem:[%s191 + $0x4a0] sm:$0xff] %v1210
        %1643 = vst [vmem:[%s191 + $0x4a8] sm:$0xff] %v1211
        %1644 = vst [vmem:[%s191 + $0x4b0] sm:$0xff] %v1212
        %1645 = vst [vmem:[%s191 + $0x4b8] sm:$0xff] %v1213
        %1646 = vst [vmem:[%s191 + $0x4c0] sm:$0xff] %v1214
        %1647 = vst [vmem:[%s191 + $0x4c8] sm:$0xff] %v1215
        %1648 = vst [vmem:[%s191 + $0x4d0] sm:$0xff] %v1216
        %1649 = vst [vmem:[%s191 + $0x4d8] sm:$0xff] %v1217
        %1650 = vst [vmem:[%s191 + $0x4e0] sm:$0xff] %v1218
        %1651 = vst [vmem:[%s191 + $0x4e8] sm:$0xff] %v1219
        %1652 = vst [vmem:[%s191 + $0x4f0] sm:$0xff] %v1220
        %1653 = vst [vmem:[%s191 + $0x4f8] sm:$0xff] %v1221
        %1654 = vst [vmem:[%s191 + $0x500] sm:$0xff] %v1222
        %1655 = vst [vmem:[%s191 + $0x508] sm:$0xff] %v1223
        %1656 = vst [vmem:[%s191 + $0x510] sm:$0xff] %v1224
        %1657 = vst [vmem:[%s191 + $0x518] sm:$0xff] %v1225
        %1658 = vst [vmem:[%s191 + $0x520] sm:$0xff] %v1226
        %1659 = vst [vmem:[%s191 + $0x528] sm:$0xff] %v1227
        %1660 = vst [vmem:[%s191 + $0x530] sm:$0xff] %v1228
        %1661 = vst [vmem:[%s191 + $0x538] sm:$0xff] %v1229
        %1662 = vst [vmem:[%s191 + $0x540] sm:$0xff] %v1230
        %1663 = vst [vmem:[%s191 + $0x548] sm:$0xff] %v1231
        %1664 = vst [vmem:[%s191 + $0x550] sm:$0xff] %v1232
        %1665 = vst [vmem:[%s191 + $0x558] sm:$0xff] %v1233
        %1666 = vst [vmem:[%s191 + $0x560] sm:$0xff] %v1234
        %1667 = vst [vmem:[%s191 + $0x568] sm:$0xff] %v1235
        %1668 = vst [vmem:[%s191 + $0x570] sm:$0xff] %v1236
        %1669 = vst [vmem:[%s191 + $0x578] sm:$0xff] %v1237
        %1670 = vst [vmem:[%s191 + $0x580] sm:$0xff] %v1238
        %1671 = vst [vmem:[%s191 + $0x588] sm:$0xff] %v1239
        %1672 = vst [vmem:[%s191 + $0x590] sm:$0xff] %v1240
        %1673 = vst [vmem:[%s191 + $0x598] sm:$0xff] %v1241
        %1674 = vst [vmem:[%s191 + $0x5a0] sm:$0xff] %v1242
        %1675 = vst [vmem:[%s191 + $0x5a8] sm:$0xff] %v1243
        %1676 = vst [vmem:[%s191 + $0x5b0] sm:$0xff] %v1244
        %1677 = vst [vmem:[%s191 + $0x5b8] sm:$0xff] %v1245
        %1678 = vst [vmem:[%s191 + $0x5c0] sm:$0xff] %v1246
        %1679 = vst [vmem:[%s191 + $0x5c8] sm:$0xff] %v1247
        %1680 = vst [vmem:[%s191 + $0x5d0] sm:$0xff] %v1248
        %1681 = vst [vmem:[%s191 + $0x5d8] sm:$0xff] %v1249
        %1682 = vst [vmem:[%s191 + $0x5e0] sm:$0xff] %v1250
        %1683 = vst [vmem:[%s191 + $0x5e8] sm:$0xff] %v1251
        %1684 = vst [vmem:[%s191 + $0x5f0] sm:$0xff] %v1252
        %1685 = vst [vmem:[%s191 + $0x5f8] sm:$0xff] %v1253
        %1686 = vst [vmem:[%s191 + $0x600] sm:$0xff] %v1254
        %1687 = vst [vmem:[%s191 + $0x608] sm:$0xff] %v1255
        %1688 = vst [vmem:[%s191 + $0x610] sm:$0xff] %v1256
        %1689 = vst [vmem:[%s191 + $0x618] sm:$0xff] %v1257
        %1690 = vst [vmem:[%s191 + $0x620] sm:$0xff] %v1258
        %1691 = vst [vmem:[%s191 + $0x628] sm:$0xff] %v1259
        %1692 = vst [vmem:[%s191 + $0x630] sm:$0xff] %v1260
        %1693 = vst [vmem:[%s191 + $0x638] sm:$0xff] %v1261
        %1694 = vst [vmem:[%s191 + $0x640] sm:$0xff] %v1262
        %1695 = vst [vmem:[%s191 + $0x648] sm:$0xff] %v1263
        %1696 = vst [vmem:[%s191 + $0x650] sm:$0xff] %v1264
        %1697 = vst [vmem:[%s191 + $0x658] sm:$0xff] %v1265
        %1698 = vst [vmem:[%s191 + $0x660] sm:$0xff] %v1266
        %1699 = vst [vmem:[%s191 + $0x668] sm:$0xff] %v1267
        %1700 = vst [vmem:[%s191 + $0x670] sm:$0xff] %v1268
        %1701 = vst [vmem:[%s191 + $0x678] sm:$0xff] %v1269
        %1702 = vst [vmem:[%s191 + $0x680] sm:$0xff] %v1270
        %1703 = vst [vmem:[%s191 + $0x688] sm:$0xff] %v1271
        %1704 = vst [vmem:[%s191 + $0x690] sm:$0xff] %v1272
        %1705 = vst [vmem:[%s191 + $0x698] sm:$0xff] %v1273
        %1706 = vst [vmem:[%s191 + $0x6a0] sm:$0xff] %v1274
        %1707 = vst [vmem:[%s191 + $0x6a8] sm:$0xff] %v1275
        %1708 = vst [vmem:[%s191 + $0x6b0] sm:$0xff] %v1276
        %1709 = vst [vmem:[%s191 + $0x6b8] sm:$0xff] %v1277
        %1710 = vst [vmem:[%s191 + $0x6c0] sm:$0xff] %v1278
        %1711 = vst [vmem:[%s191 + $0x6c8] sm:$0xff] %v1279
        %1712 = vst [vmem:[%s191 + $0x6d0] sm:$0xff] %v1280
        %1713 = vst [vmem:[%s191 + $0x6d8] sm:$0xff] %v1281
        %1714 = vst [vmem:[%s191 + $0x6e0] sm:$0xff] %v1282
        %1715 = vst [vmem:[%s191 + $0x6e8] sm:$0xff] %v1283
        %1716 = vst [vmem:[%s191 + $0x6f0] sm:$0xff] %v1284
        %1717 = vst [vmem:[%s191 + $0x6f8] sm:$0xff] %v1285
        %1718 = vst [vmem:[%s191 + $0x700] sm:$0xff] %v1286
        %1719 = vst [vmem:[%s191 + $0x708] sm:$0xff] %v1287
        %1720 = vst [vmem:[%s191 + $0x710] sm:$0xff] %v1288
        %1721 = vst [vmem:[%s191 + $0x718] sm:$0xff] %v1289
        %1722 = vst [vmem:[%s191 + $0x720] sm:$0xff] %v1290
        %1723 = vst [vmem:[%s191 + $0x728] sm:$0xff] %v1291
        %1724 = vst [vmem:[%s191 + $0x730] sm:$0xff] %v1292
        %1725 = vst [vmem:[%s191 + $0x738] sm:$0xff] %v1293
        %1726 = vst [vmem:[%s191 + $0x740] sm:$0xff] %v1294
        %1727 = vst [vmem:[%s191 + $0x748] sm:$0xff] %v1295
        %1728 = vst [vmem:[%s191 + $0x750] sm:$0xff] %v1296
        %1729 = vst [vmem:[%s191 + $0x758] sm:$0xff] %v1297
        %1730 = vst [vmem:[%s191 + $0x760] sm:$0xff] %v1298
        %1731 = vst [vmem:[%s191 + $0x768] sm:$0xff] %v1299
        %1732 = vst [vmem:[%s191 + $0x770] sm:$0xff] %v1300
        %1733 = vst [vmem:[%s191 + $0x778] sm:$0xff] %v1301
        %1734 = vst [vmem:[%s191 + $0x780] sm:$0xff] %v1302
        %1735 = vst [vmem:[%s191 + $0x788] sm:$0xff] %v1303
        %1736 = vst [vmem:[%s191 + $0x790] sm:$0xff] %v1304
        %1737 = vst [vmem:[%s191 + $0x798] sm:$0xff] %v1305
        %1738 = vst [vmem:[%s191 + $0x7a0] sm:$0xff] %v1306
        %1739 = vst [vmem:[%s191 + $0x7a8] sm:$0xff] %v1307
        %1740 = vst [vmem:[%s191 + $0x7b0] sm:$0xff] %v1308
        %1741 = vst [vmem:[%s191 + $0x7b8] sm:$0xff] %v1309
        %1742 = vst [vmem:[%s191 + $0x7c0] sm:$0xff] %v1310
        %1743 = vst [vmem:[%s191 + $0x7c8] sm:$0xff] %v1311
        %1744 = vst [vmem:[%s191 + $0x7d0] sm:$0xff] %v1312
        %1745 = vst [vmem:[%s191 + $0x7d8] sm:$0xff] %v1313
        %1746 = vst [vmem:[%s191 + $0x7e0] sm:$0xff] %v1314
        %1747 = vst [vmem:[%s191 + $0x7e8] sm:$0xff] %v1315
        %1748 = vst [vmem:[%s191 + $0x7f0] sm:$0xff] %v1316
        %1749 = vst [vmem:[%s191 + $0x7f8] sm:$0xff] %v1317
        %1750 = vst [vmem:[%s191 + $0x800] sm:$0xff] %v1318
        %1751 = vst [vmem:[%s191 + $0x808] sm:$0xff] %v1319
        %1752 = vst [vmem:[%s191 + $0x810] sm:$0xff] %v1320
        %1753 = vst [vmem:[%s191 + $0x818] sm:$0xff] %v1321
        %1754 = vst [vmem:[%s191 + $0x820] sm:$0xff] %v1322
        %1755 = vst [vmem:[%s191 + $0x828] sm:$0xff] %v1323
        %1756 = vst [vmem:[%s191 + $0x830] sm:$0xff] %v1324
        %1757 = vst [vmem:[%s191 + $0x838] sm:$0xff] %v1325
        %1758 = vst [vmem:[%s191 + $0x840] sm:$0xff] %v1326
        %1759 = vst [vmem:[%s191 + $0x848] sm:$0xff] %v1327
        %1760 = vst [vmem:[%s191 + $0x850] sm:$0xff] %v1328
        %1761 = vst [vmem:[%s191 + $0x858] sm:$0xff] %v1329
        %1762 = vst [vmem:[%s191 + $0x860] sm:$0xff] %v1330
        %1763 = vst [vmem:[%s191 + $0x868] sm:$0xff] %v1331
        %1764 = vst [vmem:[%s191 + $0x870] sm:$0xff] %v1332
        %1765 = vst [vmem:[%s191 + $0x878] sm:$0xff] %v1333
        %1766 = vst [vmem:[%s191 + $0x880] sm:$0xff] %v1334
        %1767 = vst [vmem:[%s191 + $0x888] sm:$0xff] %v1335
        %1768 = vst [vmem:[%s191 + $0x890] sm:$0xff] %v1336
        %1769 = vst [vmem:[%s191 + $0x898] sm:$0xff] %v1337
        %1770 = vst [vmem:[%s191 + $0x8a0] sm:$0xff] %v1338
        %1771 = vst [vmem:[%s191 + $0x8a8] sm:$0xff] %v1339
        %1772 = vst [vmem:[%s191 + $0x8b0] sm:$0xff] %v1340
        %1773 = vst [vmem:[%s191 + $0x8b8] sm:$0xff] %v1341
        %1774 = vst [vmem:[%s191 + $0x8c0] sm:$0xff] %v1342
        %1775 = vst [vmem:[%s191 + $0x8c8] sm:$0xff] %v1343
        %1776 = vst [vmem:[%s191 + $0x8d0] sm:$0xff] %v1344
        %1777 = vst [vmem:[%s191 + $0x8d8] sm:$0xff] %v1345
        %1778 = vst [vmem:[%s191 + $0x8e0] sm:$0xff] %v1346
        %1779 = vst [vmem:[%s191 + $0x8e8] sm:$0xff] %v1347
        %1780 = vst [vmem:[%s191 + $0x8f0] sm:$0xff] %v1348
        %1781 = vst [vmem:[%s191 + $0x8f8] sm:$0xff] %v1349
        %1782 = vst [vmem:[%s191 + $0x900] sm:$0xff] %v1350
        %1783 = vst [vmem:[%s191 + $0x908] sm:$0xff] %v1351
        %1784 = vst [vmem:[%s191 + $0x910] sm:$0xff] %v1352
        %1785 = vst [vmem:[%s191 + $0x918] sm:$0xff] %v1353
        %1786 = vst [vmem:[%s191 + $0x920] sm:$0xff] %v1354
        %1787 = vst [vmem:[%s191 + $0x928] sm:$0xff] %v1355
        %1788 = vst [vmem:[%s191 + $0x930] sm:$0xff] %v1356
        %1789 = vst [vmem:[%s191 + $0x938] sm:$0xff] %v1357
        %1790 = vst [vmem:[%s191 + $0x940] sm:$0xff] %v1358
        %1791 = vst [vmem:[%s191 + $0x948] sm:$0xff] %v1359
        %1792 = vst [vmem:[%s191 + $0x950] sm:$0xff] %v1360
        %1793 = vst [vmem:[%s191 + $0x958] sm:$0xff] %v1361
        %1794 = vst [vmem:[%s191 + $0x960] sm:$0xff] %v1362
        %1795 = vst [vmem:[%s191 + $0x968] sm:$0xff] %v1363
        %1796 = vst [vmem:[%s191 + $0x970] sm:$0xff] %v1364
        %1797 = vst [vmem:[%s191 + $0x978] sm:$0xff] %v1365
        %1798 = vst [vmem:[%s191 + $0x980] sm:$0xff] %v1366
        %1799 = vst [vmem:[%s191 + $0x988] sm:$0xff] %v1367
        %1800 = vst [vmem:[%s191 + $0x990] sm:$0xff] %v1368
        %1801 = vst [vmem:[%s191 + $0x998] sm:$0xff] %v1369
        %1802 = vst [vmem:[%s191 + $0x9a0] sm:$0xff] %v1370
        %1803 = vst [vmem:[%s191 + $0x9a8] sm:$0xff] %v1371
        %1804 = vst [vmem:[%s191 + $0x9b0] sm:$0xff] %v1372
        %1805 = vst [vmem:[%s191 + $0x9b8] sm:$0xff] %v1373
        %1806 = vst [vmem:[%s191 + $0x9c0] sm:$0xff] %v1374
        %1807 = vst [vmem:[%s191 + $0x9c8] sm:$0xff] %v1375
        %1808 = vst [vmem:[%s191 + $0x9d0] sm:$0xff] %v1376
        %1809 = vst [vmem:[%s191 + $0x9d8] sm:$0xff] %v1377
        %1810 = vst [vmem:[%s191 + $0x9e0] sm:$0xff] %v1378
        %1811 = vst [vmem:[%s191 + $0x9e8] sm:$0xff] %v1379
        %1812 = vst [vmem:[%s191 + $0x9f0] sm:$0xff] %v1380
        %1813 = vst [vmem:[%s191 + $0x9f8] sm:$0xff] %v1381
        %1814 = vst [vmem:[%s191 + $0xa00] sm:$0xff] %v1382
        %1815 = vst [vmem:[%s191 + $0xa08] sm:$0xff] %v1383
        %1816 = vst [vmem:[%s191 + $0xa10] sm:$0xff] %v1384
        %1817 = vst [vmem:[%s191 + $0xa18] sm:$0xff] %v1385
        %1818 = vst [vmem:[%s191 + $0xa20] sm:$0xff] %v1386
        %1819 = vst [vmem:[%s191 + $0xa28] sm:$0xff] %v1387
        %1820 = vst [vmem:[%s191 + $0xa30] sm:$0xff] %v1388
        %1821 = vst [vmem:[%s191 + $0xa38] sm:$0xff] %v1389
        %1822 = vst [vmem:[%s191 + $0xa40] sm:$0xff] %v1390
        %1823 = vst [vmem:[%s191 + $0xa48] sm:$0xff] %v1391
        %1824 = vst [vmem:[%s191 + $0xa50] sm:$0xff] %v1392
        %1825 = vst [vmem:[%s191 + $0xa58] sm:$0xff] %v1393
        %1826 = vst [vmem:[%s191 + $0xa60] sm:$0xff] %v1394
        %1827 = vst [vmem:[%s191 + $0xa68] sm:$0xff] %v1395
        %1828 = vst [vmem:[%s191 + $0xa70] sm:$0xff] %v1396
        %1829 = vst [vmem:[%s191 + $0xa78] sm:$0xff] %v1397
        %1830 = vst [vmem:[%s191 + $0xa80] sm:$0xff] %v1398
        %1831 = vst [vmem:[%s191 + $0xa88] sm:$0xff] %v1399
        %1832 = vst [vmem:[%s191 + $0xa90] sm:$0xff] %v1400
        %1833 = vst [vmem:[%s191 + $0xa98] sm:$0xff] %v1401
        %1834 = vst [vmem:[%s191 + $0xaa0] sm:$0xff] %v1402
        %1835 = vst [vmem:[%s191 + $0xaa8] sm:$0xff] %v1403
        %1836 = vst [vmem:[%s191 + $0xab0] sm:$0xff] %v1404
        %1837 = vst [vmem:[%s191 + $0xab8] sm:$0xff] %v1405
        %1838 = vst [vmem:[%s191 + $0xac0] sm:$0xff] %v1406
        %1839 = vst [vmem:[%s191 + $0xac8] sm:$0xff] %v1407
        %1840 = vst [vmem:[%s191 + $0xad0] sm:$0xff] %v1408
        %1841 = vst [vmem:[%s191 + $0xad8] sm:$0xff] %v1409
        %1842 = vst [vmem:[%s191 + $0xae0] sm:$0xff] %v1410
        %1843 = vst [vmem:[%s191 + $0xae8] sm:$0xff] %v1411
        %1844 = vst [vmem:[%s191 + $0xaf0] sm:$0xff] %v1412
        %1845 = vst [vmem:[%s191 + $0xaf8] sm:$0xff] %v1413
        %1846 = vst [vmem:[%s191 + $0xb00] sm:$0xff] %v1414
        %1847 = vst [vmem:[%s191 + $0xb08] sm:$0xff] %v1415
        %1848 = vst [vmem:[%s191 + $0xb10] sm:$0xff] %v1416
        %1849 = vst [vmem:[%s191 + $0xb18] sm:$0xff] %v1417
        %1850 = vst [vmem:[%s191 + $0xb20] sm:$0xff] %v1418
        %1851 = vst [vmem:[%s191 + $0xb28] sm:$0xff] %v1419
        %1852 = vst [vmem:[%s191 + $0xb30] sm:$0xff] %v1420
        %1853 = vst [vmem:[%s191 + $0xb38] sm:$0xff] %v1421
        %1854 = vst [vmem:[%s191 + $0xb40] sm:$0xff] %v1422
        %1855 = vst [vmem:[%s191 + $0xb48] sm:$0xff] %v1423
        %1856 = vst [vmem:[%s191 + $0xb50] sm:$0xff] %v1424
        %1857 = vst [vmem:[%s191 + $0xb58] sm:$0xff] %v1425
        %1858 = vst [vmem:[%s191 + $0xb60] sm:$0xff] %v1426
        %1859 = vst [vmem:[%s191 + $0xb68] sm:$0xff] %v1427
        %1860 = vst [vmem:[%s191 + $0xb70] sm:$0xff] %v1428
        %1861 = vst [vmem:[%s191 + $0xb78] sm:$0xff] %v1429
        %1862 = vst [vmem:[%s191 + $0xb80] sm:$0xff] %v1430
        %1863 = vst [vmem:[%s191 + $0xb88] sm:$0xff] %v1431
        %1864 = vst [vmem:[%s191 + $0xb90] sm:$0xff] %v1432
        %1865 = vst [vmem:[%s191 + $0xb98] sm:$0xff] %v1433
        %1866 = vst [vmem:[%s191 + $0xba0] sm:$0xff] %v1434
        %1867 = vst [vmem:[%s191 + $0xba8] sm:$0xff] %v1435
        %1868 = vst [vmem:[%s191 + $0xbb0] sm:$0xff] %v1436
        %1869 = vst [vmem:[%s191 + $0xbb8] sm:$0xff] %v1437
        %1870 = vst [vmem:[%s191 + $0xbc0] sm:$0xff] %v1438
        %1871 = vst [vmem:[%s191 + $0xbc8] sm:$0xff] %v1439
        %1872 = vst [vmem:[%s191 + $0xbd0] sm:$0xff] %v1440
        %1873 = vst [vmem:[%s191 + $0xbd8] sm:$0xff] %v1441
        %1874 = vst [vmem:[%s191 + $0xbe0] sm:$0xff] %v1442
        %1875 = vst [vmem:[%s191 + $0xbe8] sm:$0xff] %v1443
        %1876 = vst [vmem:[%s191 + $0xbf0] sm:$0xff] %v1444
        %1877 = vst [vmem:[%s191 + $0xbf8] sm:$0xff] %v1445
        %1878 = vst [vmem:[%s191 + $0xc00] sm:$0xff] %v1446
        %1879 = vst [vmem:[%s191 + $0xc08] sm:$0xff] %v1447
        %1880 = vst [vmem:[%s191 + $0xc10] sm:$0xff] %v1448
        %1881 = vst [vmem:[%s191 + $0xc18] sm:$0xff] %v1449
        %1882 = vst [vmem:[%s191 + $0xc20] sm:$0xff] %v1450
        %1883 = vst [vmem:[%s191 + $0xc28] sm:$0xff] %v1451
        %1884 = vst [vmem:[%s191 + $0xc30] sm:$0xff] %v1452
        %1885 = vst [vmem:[%s191 + $0xc38] sm:$0xff] %v1453
        %1886 = vst [vmem:[%s191 + $0xc40] sm:$0xff] %v1454
        %1887 = vst [vmem:[%s191 + $0xc48] sm:$0xff] %v1455
        %1888 = vst [vmem:[%s191 + $0xc50] sm:$0xff] %v1456
        %1889 = vst [vmem:[%s191 + $0xc58] sm:$0xff] %v1457
        %1890 = vst [vmem:[%s191 + $0xc60] sm:$0xff] %v1458
        %1891 = vst [vmem:[%s191 + $0xc68] sm:$0xff] %v1459
        %1892 = vst [vmem:[%s191 + $0xc70] sm:$0xff] %v1460
        %1893 = vst [vmem:[%s191 + $0xc78] sm:$0xff] %v1461
        %1894 = vst [vmem:[%s191 + $0xc80] sm:$0xff] %v1462
        %1895 = vst [vmem:[%s191 + $0xc88] sm:$0xff] %v1463
        %1896 = vst [vmem:[%s191 + $0xc90] sm:$0xff] %v1464
        %1897 = vst [vmem:[%s191 + $0xc98] sm:$0xff] %v1465
        %1898 = vst [vmem:[%s191 + $0xca0] sm:$0xff] %v1466
        %1899 = vst [vmem:[%s191 + $0xca8] sm:$0xff] %v1467
        %1900 = vst [vmem:[%s191 + $0xcb0] sm:$0xff] %v1468
        %1901 = vst [vmem:[%s191 + $0xcb8] sm:$0xff] %v1469
        %1902 = vst [vmem:[%s191 + $0xcc0] sm:$0xff] %v1470
        %1903 = vst [vmem:[%s191 + $0xcc8] sm:$0xff] %v1471
        %1904 = vst [vmem:[%s191 + $0xcd0] sm:$0xff] %v1472
        %1905 = vst [vmem:[%s191 + $0xcd8] sm:$0xff] %v1473
        %1906 = vst [vmem:[%s191 + $0xce0] sm:$0xff] %v1474
        %1907 = vst [vmem:[%s191 + $0xce8] sm:$0xff] %v1475
        %1908 = vst [vmem:[%s191 + $0xcf0] sm:$0xff] %v1476
        %1909 = vst [vmem:[%s191 + $0xcf8] sm:$0xff] %v1477
        %1910 = vst [vmem:[%s191 + $0xd00] sm:$0xff] %v1478
        %1911 = vst [vmem:[%s191 + $0xd08] sm:$0xff] %v1479
        %1912 = vst [vmem:[%s191 + $0xd10] sm:$0xff] %v1480
        %1913 = vst [vmem:[%s191 + $0xd18] sm:$0xff] %v1481
        %1914 = vst [vmem:[%s191 + $0xd20] sm:$0xff] %v1482
        %1915 = vst [vmem:[%s191 + $0xd28] sm:$0xff] %v1483
        %1916 = vst [vmem:[%s191 + $0xd30] sm:$0xff] %v1484
        %1917 = vst [vmem:[%s191 + $0xd38] sm:$0xff] %v1485
        %1918 = vst [vmem:[%s191 + $0xd40] sm:$0xff] %v1486
        %1919 = vst [vmem:[%s191 + $0xd48] sm:$0xff] %v1487
        %1920 = vst [vmem:[%s191 + $0xd50] sm:$0xff] %v1488
        %1921 = vst [vmem:[%s191 + $0xd58] sm:$0xff] %v1489
        %1922 = vst [vmem:[%s191 + $0xd60] sm:$0xff] %v1490
        %1923 = vst [vmem:[%s191 + $0xd68] sm:$0xff] %v1491
        %1924 = vst [vmem:[%s191 + $0xd70] sm:$0xff] %v1492
        %1925 = vst [vmem:[%s191 + $0xd78] sm:$0xff] %v1493
        %s1926 = sand.u32 %s98, 1
        %s1927 = scalar_lea.sflag [#allocation6], %s1926
        %s1928 = sand.u32 %s98, 1
        %s1929 = smul.addr %s1928, 3456
        %s1930 = scalar_lea.vmem [#allocation7], %s1929
        // Predicated region
        $region37: #{tpu_custom_call.1} parent=31 // pred_check
          %p1931 = pneg %p108
        $region38: #{tpu_custom_call.1} parent=31 // pred_check_branch
          %1933 = sbr.rel (%p1931) target = $region40
        $region39: #{tpu_custom_call.1} parent=31 // pred_region
          %s1934 = smul.u32 54, %s22
          %s1936 = ssub.s32 55296, 55296
          %1937 = vsyncadd %s1927, %s1936
          %s1938 = smul.addr %s1934, 8
          %s1939 = smul.addr %s1938, 128
          %s1940 = scalar_lea.hbm %s3, %s1939
          %s1941 = sshll.u32 %s1930, 4
          %s1942 = int_to_ptr.vmem [resolvable:$true] %s1941
          %1947 = dma.vmem_to_hbm [thread:$0]  %s1942, 55296, %s1940, %s1927, 1024, 1024, 64
        $region40: #{tpu_custom_call.1} parent=31 // pred_fallthru
          _
      $region32: #{tpu_custom_call.1} parent=5 // pred_fallthru
        _
      %p1948 = scmp.le.s32.totalorder 2, %s17
      // Predicated region
      $region41: #{tpu_custom_call.1} parent=5 // pred_check
        %p1949 = pneg %p1948
      $region42: #{tpu_custom_call.1} parent=5 // pred_check_branch
        %1951 = sbr.rel (%p1949) target = $region44
      $region43: #{tpu_custom_call.1} parent=5 // pred_region
        %s1952 = ssub.s32 %s17, 2
        // Predicated region
        $region45: #{tpu_custom_call.1} parent=43 // pred_check
          %p1953 = pneg %p114
        $region46: #{tpu_custom_call.1} parent=43 // pred_check_branch
          %1955 = sbr.rel (%p1953) target = $region48
        $region47: #{tpu_custom_call.1} parent=43 // pred_region
          %s1956 = sand.u32 %s99, 1
          %s1957 = scalar_lea.sflag [#allocation6], %s1956
          %s1958 = sand.u32 %s99, 1
          %s1959 = smul.addr %s1958, 3456
          %s1960 = scalar_lea.vmem [#allocation7], %s1959
          %1961 = dma.done %s1957, 55296
        $region48: #{tpu_custom_call.1} parent=43 // pred_fallthru
          _
      $region44: #{tpu_custom_call.1} parent=5 // pred_fallthru
        _
    $region6: #{tpu_custom_call.1} parent=1 // loop_footer
      %s21 = sadd.s32 1, %s17
    $region7: #{tpu_custom_call.1} parent=1 // loop_footer_branch
      %16 = sbr.rel target = $region3
    $region8: #{tpu_custom_call.1} parent=1 // loop_exit
      _
    %1962 = vsyncpa [#allocation5], 1
    %s1963 = scalar_lea.sflag [#allocation5], 1
    %1964 = vsyncpa %s1963, 1
    %1965 = vsyncpa [#allocation6], 1
    %s1966 = scalar_lea.sflag [#allocation6], 1
    %1967 = vsyncpa %s1966, 1

</llo_original>
